<compile_context>
chip_gen: v5e
topology: v5e:2x2
jax: 0.10.0
libtpu: 0.0.40
codegen_flags: <defaults>
</compile_context>

<pallas_src>
import numpy as np
import jax
import jax.numpy as jnp
from jax.experimental import pallas as pl
from jax.experimental.pallas import tpu as pltpu

H = 30           # true hidden size (nn.LSTM hidden_layer_size)
HP = 128         # lane-padded hidden size (gate slab width)
HK = 32          # sublane-padded contraction size for W_hh (>= H, multiple of 8)
OUT_PAD = 128    # lane-padded output width (real output_size = 1)
B_TILE = 8       # windows processed per grid step (sublane-aligned)

# kernel slab order [i | f | o | g]  <-  torch gate order [i, f, g, o]
TORCH_GATE_FOR_SLAB = (0, 1, 3, 2)


def lstm_kernel(x_ref, wih_ref, whh_ref, b_ref, wlin_ref, blin_ref, out_ref):
    """LSTM recurrence + final Linear for one tile of B_TILE windows.

    x_ref    : VMEM (B_TILE, S)       per-window input scalars (input_size == 1)
    wih_ref  : VMEM (1, 4*HP)         W_ih^T packed per-gate [i|f|o|g]
    whh_ref  : VMEM (HK, 4*HP)        W_hh^T packed per-gate [i|f|o|g] (rows >= H zero)
    b_ref    : VMEM (1, 4*HP)         b_ih + b_hh packed per-gate [i|f|o|g]
    wlin_ref : VMEM (1, HP)           Linear weight row (padded lanes zero)
    blin_ref : SMEM (1,)              Linear bias scalar
    out_ref  : VMEM (B_TILE, OUT_PAD) prediction broadcast across lanes (col 0 used)
    """
    btile, seq_len = x_ref.shape

    wih = wih_ref[...]        # (1, 4*HP)
    bias = b_ref[...]         # (1, 4*HP)

    h = jnp.zeros((btile, HP), jnp.float32)
    c = jnp.zeros((btile, HP), jnp.float32)

    # Fully unrolled recurrence (seq_len is static and small, <= 32).
    for t in range(seq_len):
        # Input projection for this step: independent of h, overlaps with the
        # previous step's MXU/EUP tail.
        gx = x_ref[:, t:t + 1] * wih + bias                        # (B, 4*HP)
        # Recurrent projection: contraction over HK=32 sublane-padded rows,
        # RHS streamed from VMEM (not hoisted into vregs).
        gates = gx + jnp.dot(h[:, :HK], whh_ref[...],
                             preferred_element_type=jnp.float32)   # (B, 4*HP)
        sig = jax.nn.sigmoid(gates[:, : 3 * HP])   # [i | f | o] -- one EUP pass
        g_g = jnp.tanh(gates[:, 3 * HP:])          # g           -- one EUP pass
        i_g = sig[:, 0 * HP:1 * HP]
        f_g = sig[:, 1 * HP:2 * HP]
        o_g = sig[:, 2 * HP:3 * HP]
        c = f_g * c + i_g * g_g
        h = o_g * jnp.tanh(c)

    # Final Linear on the last hidden state (predictions[-1]) of each window:
    # VPU multiply + XLU lane reduction -- no MXU push for a 1-column result.
    pred = jnp.sum(h * wlin_ref[...], axis=-1, keepdims=True) + blin_ref[0]
    out_ref[...] = jnp.broadcast_to(pred, (btile, OUT_PAD))   # lane-dense store


def lstm_forward(x_windows, wih_pad, whh_pad, b_pad, wlin_pad, b_lin):
    """Batched LSTM forward: each row of x_windows is one input_seq.

    x_windows : (num_windows, seq_len) float32
    Returns   : (num_windows,) float32  -- predictions[-1] for each window.
    """
    num_windows, seq_len = x_windows.shape
    # Pad the window count to a multiple of B_TILE (padded rows are discarded).
    num_pad = -num_windows % B_TILE
    if num_pad:
        x_windows = jnp.concatenate(
            [x_windows, jnp.zeros((num_pad, seq_len), jnp.float32)], axis=0)
    nw = num_windows + num_pad

    out = pl.pallas_call(
        lstm_kernel,
        out_shape=jax.ShapeDtypeStruct((nw, OUT_PAD), jnp.float32),
        grid=(nw // B_TILE,),
        in_specs=[
            pl.BlockSpec((B_TILE, seq_len), lambda i: (i, 0)),    # x tile
            pl.BlockSpec((1, 4 * HP), lambda i: (0, 0)),          # W_ih  (resident)
            pl.BlockSpec((HK, 4 * HP), lambda i: (0, 0)),         # W_hh  (resident)
            pl.BlockSpec((1, 4 * HP), lambda i: (0, 0)),          # bias  (resident)
            pl.BlockSpec((1, HP), lambda i: (0, 0)),              # W_lin (resident)
            pl.BlockSpec(memory_space=pltpu.MemorySpace.SMEM),    # b_lin scalar
        ],
        out_specs=pl.BlockSpec((B_TILE, OUT_PAD), lambda i: (i, 0)),
        compiler_params=pltpu.CompilerParams(
            dimension_semantics=("parallel",)),   # v7x: window tiles across both TCs
    )(x_windows, wih_pad, whh_pad, b_pad, wlin_pad, b_lin)
    return out[:num_windows, 0]


def make_params(key):
    """Deterministic init matching torch's U(-1/sqrt(H), 1/sqrt(H)) shapes."""
    k = 1.0 / np.sqrt(H)
    keys = jax.random.split(key, 6)
    w_ih = jax.random.uniform(keys[0], (4 * H, 1), jnp.float32, -k, k)   # (4H, in)
    w_hh = jax.random.uniform(keys[1], (4 * H, H), jnp.float32, -k, k)   # (4H, H)
    b_ih = jax.random.uniform(keys[2], (4 * H,), jnp.float32, -k, k)
    b_hh = jax.random.uniform(keys[3], (4 * H,), jnp.float32, -k, k)
    w_lin = jax.random.uniform(keys[4], (1, H), jnp.float32, -k, k)      # (out, H)
    b_lin = jax.random.uniform(keys[5], (1,), jnp.float32, -k, k)
    return w_ih, w_hh, b_ih, b_hh, w_lin, b_lin


def pack_params(w_ih, w_hh, b_ih, b_hh, w_lin):
    """Pack/pad torch-layout params into lane-padded kernel layout [i|f|o|g].

    INVARIANT: every padded lane/row must stay exactly zero -- the kernel
    relies on it to keep padded h/c lanes at 0 without masking.
    """
    w_ih = np.asarray(w_ih)
    w_hh = np.asarray(w_hh)
    b_sum = np.asarray(b_ih) + np.asarray(b_hh)
    w_lin = np.asarray(w_lin)

    wih_pad = np.zeros((1, 4 * HP), np.float32)
    whh_pad = np.zeros((HK, 4 * HP), np.float32)
    b_pad = np.zeros((1, 4 * HP), np.float32)
    for slab, tg in enumerate(TORCH_GATE_FOR_SLAB):
        wih_pad[0, slab * HP:slab * HP + H] = w_ih[tg * H:(tg + 1) * H, 0]
        whh_pad[:H, slab * HP:slab * HP + H] = w_hh[tg * H:(tg + 1) * H, :].T
        b_pad[0, slab * HP:slab * HP + H] = b_sum[tg * H:(tg + 1) * H]
    wlin_pad = np.zeros((1, HP), np.float32)
    wlin_pad[0, :H] = w_lin[0, :]

    # Assert the padded-lane-zero invariant (perf-review correctness note).
    lane_mask = np.zeros((4 * HP,), bool)
    for slab in range(4):
        lane_mask[slab * HP:slab * HP + H] = True
    assert not wih_pad[0, ~lane_mask].any()
    assert not b_pad[0, ~lane_mask].any()
    assert not whh_pad[:, ~lane_mask].any() and not whh_pad[H:, :].any()
    assert not wlin_pad[0, H:].any()

    return (jnp.asarray(wih_pad), jnp.asarray(whh_pad),
            jnp.asarray(b_pad), jnp.asarray(wlin_pad))


def lstm_ref(x, w_ih, w_hh, b_ih, b_hh, w_lin, b_lin):
    """Pure-JAX reference mirroring torch nn.LSTM + nn.Linear semantics."""
    h = jnp.zeros((H,), jnp.float32)
    c = jnp.zeros((H,), jnp.float32)
    for t in range(x.shape[0]):
        gates = w_ih[:, 0] * x[t] + w_hh @ h + b_ih + b_hh
        i = jax.nn.sigmoid(gates[0:H])
        f = jax.nn.sigmoid(gates[H:2 * H])
        g = jnp.tanh(gates[2 * H:3 * H])
        o = jax.nn.sigmoid(gates[3 * H:4 * H])
        c = f * c + i * g
        h = o * jnp.tanh(c)
    return (w_lin @ h + b_lin)[0]   # predictions[-1]


if __name__ == "__main__":
    key = jax.random.PRNGKey(0)
    pkey, xkey = jax.random.split(key)

    w_ih, w_hh, b_ih, b_hh, w_lin, b_lin = make_params(pkey)
    wih_pad, whh_pad, b_pad, wlin_pad = pack_params(w_ih, w_hh, b_ih, b_hh, w_lin)

    num_windows, seq_len = 16, 8
    x_windows = jax.random.normal(xkey, (num_windows, seq_len), jnp.float32)

    preds = lstm_forward(x_windows, wih_pad, whh_pad, b_pad, wlin_pad, b_lin)
    preds = jax.block_until_ready(preds)

    refs = np.stack([
        np.asarray(lstm_ref(x_windows[w], w_ih, w_hh, b_ih, b_hh, w_lin, b_lin))
        for w in range(num_windows)
    ])
    np.testing.assert_allclose(np.asarray(preds), refs, rtol=1e-5, atol=1e-5)

    print("KERNEL_OK")
</pallas_src>

<mosaic_0001>
module attributes {stable_mosaic.version = 11 : i64} {
  func.func @lstm_kernel(%arg0: i32, %arg1: memref<8x8xf32, #tpu.memory_space<vmem>>, %arg2: memref<1x512xf32, #tpu.memory_space<vmem>>, %arg3: memref<32x512xf32, #tpu.memory_space<vmem>>, %arg4: memref<1x512xf32, #tpu.memory_space<vmem>>, %arg5: memref<1x128xf32, #tpu.memory_space<vmem>>, %arg6: memref<1xf32, #tpu.memory_space<smem>>, %arg7: memref<8x128xf32, #tpu.memory_space<vmem>>) attributes {dimension_semantics = [#tpu.dimension_semantics<parallel>], iteration_bounds = array<i64: 2>, scalar_prefetch = 0 : i64, scratch_operands = 0 : i64, tpu.core_type = #tpu.core_type<tc>, window_params = [{transform_indices = @transform_0, window_bounds = array<i64: 8, 8>}, {pipeline_mode = #tpu.pipeline_mode<synchronous>, transform_indices = @transform_1, window_bounds = array<i64: 1, 512>}, {pipeline_mode = #tpu.pipeline_mode<synchronous>, transform_indices = @transform_2, window_bounds = array<i64: 32, 512>}, {pipeline_mode = #tpu.pipeline_mode<synchronous>, transform_indices = @transform_3, window_bounds = array<i64: 1, 512>}, {pipeline_mode = #tpu.pipeline_mode<synchronous>, transform_indices = @transform_4, window_bounds = array<i64: 1, 128>}, {transform_indices = @transform_5, window_bounds = array<i64: 1>}, {transform_indices = @transform_6, window_bounds = array<i64: 8, 128>}]} {
    %c0 = arith.constant 0 : index
    %c0_0 = arith.constant 0 : index
    %0 = vector.load %arg2[%c0, %c0_0] : memref<1x512xf32, #tpu.memory_space<vmem>>, vector<1x512xf32>
    %c0_1 = arith.constant 0 : index
    %c0_2 = arith.constant 0 : index
    %1 = vector.load %arg4[%c0_1, %c0_2] : memref<1x512xf32, #tpu.memory_space<vmem>>, vector<1x512xf32>
    %cst = arith.constant 0.000000e+00 : f32
    %2 = vector.broadcast %cst : f32 to vector<8x128xf32>
    %cst_3 = arith.constant 0.000000e+00 : f32
    %3 = vector.broadcast %cst_3 : f32 to vector<8x128xf32>
    %c0_4 = arith.constant 0 : index
    %c0_5 = arith.constant 0 : index
    %4 = vector.load %arg1[%c0_4, %c0_5] : memref<8x8xf32, #tpu.memory_space<vmem>>, vector<8x1xf32>
    %5 = vector.broadcast %4 : vector<8x1xf32> to vector<8x512xf32>
    %6 = vector.broadcast %0 : vector<1x512xf32> to vector<8x512xf32>
    %7 = arith.mulf %5, %6 : vector<8x512xf32>
    %8 = vector.broadcast %1 : vector<1x512xf32> to vector<8x512xf32>
    %9 = arith.addf %7, %8 : vector<8x512xf32>
    %10 = vector.extract_strided_slice %2 {offsets = [0, 0], sizes = [8, 32], strides = [1, 1]} : vector<8x128xf32> to vector<8x32xf32>
    %c0_6 = arith.constant 0 : index
    %c0_7 = arith.constant 0 : index
    %11 = vector.load %arg3[%c0_6, %c0_7] : memref<32x512xf32, #tpu.memory_space<vmem>>, vector<32x512xf32>
    %cst_8 = arith.constant dense<0.000000e+00> : vector<8x512xf32>
    %12 = tpu.matmul %10, %11, %cst_8 {dimension_numbers = #tpu.dot_dimension_numbers<[1], [0], [0], [1], [0, 0, 1, 1], [], []>} : vector<8x32xf32>, vector<32x512xf32>, vector<8x512xf32> -> vector<8x512xf32>
    %13 = arith.addf %9, %12 : vector<8x512xf32>
    %14 = vector.extract_strided_slice %13 {offsets = [0, 0], sizes = [8, 384], strides = [1, 1]} : vector<8x512xf32> to vector<8x384xf32>
    %15 = arith.negf %14 : vector<8x384xf32>
    %16 = math.exp %15 : vector<8x384xf32>
    %cst_9 = arith.constant 1.000000e+00 : f32
    %17 = vector.broadcast %cst_9 : f32 to vector<8x384xf32>
    %18 = arith.addf %17, %16 : vector<8x384xf32>
    %19 = arith.divf %17, %18 : vector<8x384xf32>
    %20 = vector.extract_strided_slice %13 {offsets = [0, 384], sizes = [8, 128], strides = [1, 1]} : vector<8x512xf32> to vector<8x128xf32>
    %21 = math.tanh %20 : vector<8x128xf32>
    %22 = vector.extract_strided_slice %19 {offsets = [0, 0], sizes = [8, 128], strides = [1, 1]} : vector<8x384xf32> to vector<8x128xf32>
    %23 = vector.extract_strided_slice %19 {offsets = [0, 128], sizes = [8, 128], strides = [1, 1]} : vector<8x384xf32> to vector<8x128xf32>
    %24 = vector.extract_strided_slice %19 {offsets = [0, 256], sizes = [8, 128], strides = [1, 1]} : vector<8x384xf32> to vector<8x128xf32>
    %25 = arith.mulf %23, %3 : vector<8x128xf32>
    %26 = arith.mulf %22, %21 : vector<8x128xf32>
    %27 = arith.addf %25, %26 : vector<8x128xf32>
    %28 = math.tanh %27 : vector<8x128xf32>
    %29 = arith.mulf %24, %28 : vector<8x128xf32>
    %c0_10 = arith.constant 0 : index
    %c1 = arith.constant 1 : index
    %30 = vector.load %arg1[%c0_10, %c1] : memref<8x8xf32, #tpu.memory_space<vmem>>, vector<8x1xf32>
    %31 = vector.broadcast %30 : vector<8x1xf32> to vector<8x512xf32>
    %32 = vector.broadcast %0 : vector<1x512xf32> to vector<8x512xf32>
    %33 = arith.mulf %31, %32 : vector<8x512xf32>
    %34 = vector.broadcast %1 : vector<1x512xf32> to vector<8x512xf32>
    %35 = arith.addf %33, %34 : vector<8x512xf32>
    %36 = vector.extract_strided_slice %29 {offsets = [0, 0], sizes = [8, 32], strides = [1, 1]} : vector<8x128xf32> to vector<8x32xf32>
    %c0_11 = arith.constant 0 : index
    %c0_12 = arith.constant 0 : index
    %37 = vector.load %arg3[%c0_11, %c0_12] : memref<32x512xf32, #tpu.memory_space<vmem>>, vector<32x512xf32>
    %cst_13 = arith.constant dense<0.000000e+00> : vector<8x512xf32>
    %38 = tpu.matmul %36, %37, %cst_13 {dimension_numbers = #tpu.dot_dimension_numbers<[1], [0], [0], [1], [0, 0, 1, 1], [], []>} : vector<8x32xf32>, vector<32x512xf32>, vector<8x512xf32> -> vector<8x512xf32>
    %39 = arith.addf %35, %38 : vector<8x512xf32>
    %40 = vector.extract_strided_slice %39 {offsets = [0, 0], sizes = [8, 384], strides = [1, 1]} : vector<8x512xf32> to vector<8x384xf32>
    %41 = arith.negf %40 : vector<8x384xf32>
    %42 = math.exp %41 : vector<8x384xf32>
    %cst_14 = arith.constant 1.000000e+00 : f32
    %43 = vector.broadcast %cst_14 : f32 to vector<8x384xf32>
    %44 = arith.addf %43, %42 : vector<8x384xf32>
    %45 = arith.divf %43, %44 : vector<8x384xf32>
    %46 = vector.extract_strided_slice %39 {offsets = [0, 384], sizes = [8, 128], strides = [1, 1]} : vector<8x512xf32> to vector<8x128xf32>
    %47 = math.tanh %46 : vector<8x128xf32>
    %48 = vector.extract_strided_slice %45 {offsets = [0, 0], sizes = [8, 128], strides = [1, 1]} : vector<8x384xf32> to vector<8x128xf32>
    %49 = vector.extract_strided_slice %45 {offsets = [0, 128], sizes = [8, 128], strides = [1, 1]} : vector<8x384xf32> to vector<8x128xf32>
    %50 = vector.extract_strided_slice %45 {offsets = [0, 256], sizes = [8, 128], strides = [1, 1]} : vector<8x384xf32> to vector<8x128xf32>
    %51 = arith.mulf %49, %27 : vector<8x128xf32>
    %52 = arith.mulf %48, %47 : vector<8x128xf32>
    %53 = arith.addf %51, %52 : vector<8x128xf32>
    %54 = math.tanh %53 : vector<8x128xf32>
    %55 = arith.mulf %50, %54 : vector<8x128xf32>
    %c0_15 = arith.constant 0 : index
    %c2 = arith.constant 2 : index
    %56 = vector.load %arg1[%c0_15, %c2] : memref<8x8xf32, #tpu.memory_space<vmem>>, vector<8x1xf32>
    %57 = vector.broadcast %56 : vector<8x1xf32> to vector<8x512xf32>
    %58 = vector.broadcast %0 : vector<1x512xf32> to vector<8x512xf32>
    %59 = arith.mulf %57, %58 : vector<8x512xf32>
    %60 = vector.broadcast %1 : vector<1x512xf32> to vector<8x512xf32>
    %61 = arith.addf %59, %60 : vector<8x512xf32>
    %62 = vector.extract_strided_slice %55 {offsets = [0, 0], sizes = [8, 32], strides = [1, 1]} : vector<8x128xf32> to vector<8x32xf32>
    %c0_16 = arith.constant 0 : index
    %c0_17 = arith.constant 0 : index
    %63 = vector.load %arg3[%c0_16, %c0_17] : memref<32x512xf32, #tpu.memory_space<vmem>>, vector<32x512xf32>
    %cst_18 = arith.constant dense<0.000000e+00> : vector<8x512xf32>
    %64 = tpu.matmul %62, %63, %cst_18 {dimension_numbers = #tpu.dot_dimension_numbers<[1], [0], [0], [1], [0, 0, 1, 1], [], []>} : vector<8x32xf32>, vector<32x512xf32>, vector<8x512xf32> -> vector<8x512xf32>
    %65 = arith.addf %61, %64 : vector<8x512xf32>
    %66 = vector.extract_strided_slice %65 {offsets = [0, 0], sizes = [8, 384], strides = [1, 1]} : vector<8x512xf32> to vector<8x384xf32>
    %67 = arith.negf %66 : vector<8x384xf32>
    %68 = math.exp %67 : vector<8x384xf32>
    %cst_19 = arith.constant 1.000000e+00 : f32
    %69 = vector.broadcast %cst_19 : f32 to vector<8x384xf32>
    %70 = arith.addf %69, %68 : vector<8x384xf32>
    %71 = arith.divf %69, %70 : vector<8x384xf32>
    %72 = vector.extract_strided_slice %65 {offsets = [0, 384], sizes = [8, 128], strides = [1, 1]} : vector<8x512xf32> to vector<8x128xf32>
    %73 = math.tanh %72 : vector<8x128xf32>
    %74 = vector.extract_strided_slice %71 {offsets = [0, 0], sizes = [8, 128], strides = [1, 1]} : vector<8x384xf32> to vector<8x128xf32>
    %75 = vector.extract_strided_slice %71 {offsets = [0, 128], sizes = [8, 128], strides = [1, 1]} : vector<8x384xf32> to vector<8x128xf32>
    %76 = vector.extract_strided_slice %71 {offsets = [0, 256], sizes = [8, 128], strides = [1, 1]} : vector<8x384xf32> to vector<8x128xf32>
    %77 = arith.mulf %75, %53 : vector<8x128xf32>
    %78 = arith.mulf %74, %73 : vector<8x128xf32>
    %79 = arith.addf %77, %78 : vector<8x128xf32>
    %80 = math.tanh %79 : vector<8x128xf32>
    %81 = arith.mulf %76, %80 : vector<8x128xf32>
    %c0_20 = arith.constant 0 : index
    %c3 = arith.constant 3 : index
    %82 = vector.load %arg1[%c0_20, %c3] : memref<8x8xf32, #tpu.memory_space<vmem>>, vector<8x1xf32>
    %83 = vector.broadcast %82 : vector<8x1xf32> to vector<8x512xf32>
    %84 = vector.broadcast %0 : vector<1x512xf32> to vector<8x512xf32>
    %85 = arith.mulf %83, %84 : vector<8x512xf32>
    %86 = vector.broadcast %1 : vector<1x512xf32> to vector<8x512xf32>
    %87 = arith.addf %85, %86 : vector<8x512xf32>
    %88 = vector.extract_strided_slice %81 {offsets = [0, 0], sizes = [8, 32], strides = [1, 1]} : vector<8x128xf32> to vector<8x32xf32>
    %c0_21 = arith.constant 0 : index
    %c0_22 = arith.constant 0 : index
    %89 = vector.load %arg3[%c0_21, %c0_22] : memref<32x512xf32, #tpu.memory_space<vmem>>, vector<32x512xf32>
    %cst_23 = arith.constant dense<0.000000e+00> : vector<8x512xf32>
    %90 = tpu.matmul %88, %89, %cst_23 {dimension_numbers = #tpu.dot_dimension_numbers<[1], [0], [0], [1], [0, 0, 1, 1], [], []>} : vector<8x32xf32>, vector<32x512xf32>, vector<8x512xf32> -> vector<8x512xf32>
    %91 = arith.addf %87, %90 : vector<8x512xf32>
    %92 = vector.extract_strided_slice %91 {offsets = [0, 0], sizes = [8, 384], strides = [1, 1]} : vector<8x512xf32> to vector<8x384xf32>
    %93 = arith.negf %92 : vector<8x384xf32>
    %94 = math.exp %93 : vector<8x384xf32>
    %cst_24 = arith.constant 1.000000e+00 : f32
    %95 = vector.broadcast %cst_24 : f32 to vector<8x384xf32>
    %96 = arith.addf %95, %94 : vector<8x384xf32>
    %97 = arith.divf %95, %96 : vector<8x384xf32>
    %98 = vector.extract_strided_slice %91 {offsets = [0, 384], sizes = [8, 128], strides = [1, 1]} : vector<8x512xf32> to vector<8x128xf32>
    %99 = math.tanh %98 : vector<8x128xf32>
    %100 = vector.extract_strided_slice %97 {offsets = [0, 0], sizes = [8, 128], strides = [1, 1]} : vector<8x384xf32> to vector<8x128xf32>
    %101 = vector.extract_strided_slice %97 {offsets = [0, 128], sizes = [8, 128], strides = [1, 1]} : vector<8x384xf32> to vector<8x128xf32>
    %102 = vector.extract_strided_slice %97 {offsets = [0, 256], sizes = [8, 128], strides = [1, 1]} : vector<8x384xf32> to vector<8x128xf32>
    %103 = arith.mulf %101, %79 : vector<8x128xf32>
    %104 = arith.mulf %100, %99 : vector<8x128xf32>
    %105 = arith.addf %103, %104 : vector<8x128xf32>
    %106 = math.tanh %105 : vector<8x128xf32>
    %107 = arith.mulf %102, %106 : vector<8x128xf32>
    %c0_25 = arith.constant 0 : index
    %c4 = arith.constant 4 : index
    %108 = vector.load %arg1[%c0_25, %c4] : memref<8x8xf32, #tpu.memory_space<vmem>>, vector<8x1xf32>
    %109 = vector.broadcast %108 : vector<8x1xf32> to vector<8x512xf32>
    %110 = vector.broadcast %0 : vector<1x512xf32> to vector<8x512xf32>
    %111 = arith.mulf %109, %110 : vector<8x512xf32>
    %112 = vector.broadcast %1 : vector<1x512xf32> to vector<8x512xf32>
    %113 = arith.addf %111, %112 : vector<8x512xf32>
    %114 = vector.extract_strided_slice %107 {offsets = [0, 0], sizes = [8, 32], strides = [1, 1]} : vector<8x128xf32> to vector<8x32xf32>
    %c0_26 = arith.constant 0 : index
    %c0_27 = arith.constant 0 : index
    %115 = vector.load %arg3[%c0_26, %c0_27] : memref<32x512xf32, #tpu.memory_space<vmem>>, vector<32x512xf32>
    %cst_28 = arith.constant dense<0.000000e+00> : vector<8x512xf32>
    %116 = tpu.matmul %114, %115, %cst_28 {dimension_numbers = #tpu.dot_dimension_numbers<[1], [0], [0], [1], [0, 0, 1, 1], [], []>} : vector<8x32xf32>, vector<32x512xf32>, vector<8x512xf32> -> vector<8x512xf32>
    %117 = arith.addf %113, %116 : vector<8x512xf32>
    %118 = vector.extract_strided_slice %117 {offsets = [0, 0], sizes = [8, 384], strides = [1, 1]} : vector<8x512xf32> to vector<8x384xf32>
    %119 = arith.negf %118 : vector<8x384xf32>
    %120 = math.exp %119 : vector<8x384xf32>
    %cst_29 = arith.constant 1.000000e+00 : f32
    %121 = vector.broadcast %cst_29 : f32 to vector<8x384xf32>
    %122 = arith.addf %121, %120 : vector<8x384xf32>
    %123 = arith.divf %121, %122 : vector<8x384xf32>
    %124 = vector.extract_strided_slice %117 {offsets = [0, 384], sizes = [8, 128], strides = [1, 1]} : vector<8x512xf32> to vector<8x128xf32>
    %125 = math.tanh %124 : vector<8x128xf32>
    %126 = vector.extract_strided_slice %123 {offsets = [0, 0], sizes = [8, 128], strides = [1, 1]} : vector<8x384xf32> to vector<8x128xf32>
    %127 = vector.extract_strided_slice %123 {offsets = [0, 128], sizes = [8, 128], strides = [1, 1]} : vector<8x384xf32> to vector<8x128xf32>
    %128 = vector.extract_strided_slice %123 {offsets = [0, 256], sizes = [8, 128], strides = [1, 1]} : vector<8x384xf32> to vector<8x128xf32>
    %129 = arith.mulf %127, %105 : vector<8x128xf32>
    %130 = arith.mulf %126, %125 : vector<8x128xf32>
    %131 = arith.addf %129, %130 : vector<8x128xf32>
    %132 = math.tanh %131 : vector<8x128xf32>
    %133 = arith.mulf %128, %132 : vector<8x128xf32>
    %c0_30 = arith.constant 0 : index
    %c5 = arith.constant 5 : index
    %134 = vector.load %arg1[%c0_30, %c5] : memref<8x8xf32, #tpu.memory_space<vmem>>, vector<8x1xf32>
    %135 = vector.broadcast %134 : vector<8x1xf32> to vector<8x512xf32>
    %136 = vector.broadcast %0 : vector<1x512xf32> to vector<8x512xf32>
    %137 = arith.mulf %135, %136 : vector<8x512xf32>
    %138 = vector.broadcast %1 : vector<1x512xf32> to vector<8x512xf32>
    %139 = arith.addf %137, %138 : vector<8x512xf32>
    %140 = vector.extract_strided_slice %133 {offsets = [0, 0], sizes = [8, 32], strides = [1, 1]} : vector<8x128xf32> to vector<8x32xf32>
    %c0_31 = arith.constant 0 : index
    %c0_32 = arith.constant 0 : index
    %141 = vector.load %arg3[%c0_31, %c0_32] : memref<32x512xf32, #tpu.memory_space<vmem>>, vector<32x512xf32>
    %cst_33 = arith.constant dense<0.000000e+00> : vector<8x512xf32>
    %142 = tpu.matmul %140, %141, %cst_33 {dimension_numbers = #tpu.dot_dimension_numbers<[1], [0], [0], [1], [0, 0, 1, 1], [], []>} : vector<8x32xf32>, vector<32x512xf32>, vector<8x512xf32> -> vector<8x512xf32>
    %143 = arith.addf %139, %142 : vector<8x512xf32>
    %144 = vector.extract_strided_slice %143 {offsets = [0, 0], sizes = [8, 384], strides = [1, 1]} : vector<8x512xf32> to vector<8x384xf32>
    %145 = arith.negf %144 : vector<8x384xf32>
    %146 = math.exp %145 : vector<8x384xf32>
    %cst_34 = arith.constant 1.000000e+00 : f32
    %147 = vector.broadcast %cst_34 : f32 to vector<8x384xf32>
    %148 = arith.addf %147, %146 : vector<8x384xf32>
    %149 = arith.divf %147, %148 : vector<8x384xf32>
    %150 = vector.extract_strided_slice %143 {offsets = [0, 384], sizes = [8, 128], strides = [1, 1]} : vector<8x512xf32> to vector<8x128xf32>
    %151 = math.tanh %150 : vector<8x128xf32>
    %152 = vector.extract_strided_slice %149 {offsets = [0, 0], sizes = [8, 128], strides = [1, 1]} : vector<8x384xf32> to vector<8x128xf32>
    %153 = vector.extract_strided_slice %149 {offsets = [0, 128], sizes = [8, 128], strides = [1, 1]} : vector<8x384xf32> to vector<8x128xf32>
    %154 = vector.extract_strided_slice %149 {offsets = [0, 256], sizes = [8, 128], strides = [1, 1]} : vector<8x384xf32> to vector<8x128xf32>
    %155 = arith.mulf %153, %131 : vector<8x128xf32>
    %156 = arith.mulf %152, %151 : vector<8x128xf32>
    %157 = arith.addf %155, %156 : vector<8x128xf32>
    %158 = math.tanh %157 : vector<8x128xf32>
    %159 = arith.mulf %154, %158 : vector<8x128xf32>
    %c0_35 = arith.constant 0 : index
    %c6 = arith.constant 6 : index
    %160 = vector.load %arg1[%c0_35, %c6] : memref<8x8xf32, #tpu.memory_space<vmem>>, vector<8x1xf32>
    %161 = vector.broadcast %160 : vector<8x1xf32> to vector<8x512xf32>
    %162 = vector.broadcast %0 : vector<1x512xf32> to vector<8x512xf32>
    %163 = arith.mulf %161, %162 : vector<8x512xf32>
    %164 = vector.broadcast %1 : vector<1x512xf32> to vector<8x512xf32>
    %165 = arith.addf %163, %164 : vector<8x512xf32>
    %166 = vector.extract_strided_slice %159 {offsets = [0, 0], sizes = [8, 32], strides = [1, 1]} : vector<8x128xf32> to vector<8x32xf32>
    %c0_36 = arith.constant 0 : index
    %c0_37 = arith.constant 0 : index
    %167 = vector.load %arg3[%c0_36, %c0_37] : memref<32x512xf32, #tpu.memory_space<vmem>>, vector<32x512xf32>
    %cst_38 = arith.constant dense<0.000000e+00> : vector<8x512xf32>
    %168 = tpu.matmul %166, %167, %cst_38 {dimension_numbers = #tpu.dot_dimension_numbers<[1], [0], [0], [1], [0, 0, 1, 1], [], []>} : vector<8x32xf32>, vector<32x512xf32>, vector<8x512xf32> -> vector<8x512xf32>
    %169 = arith.addf %165, %168 : vector<8x512xf32>
    %170 = vector.extract_strided_slice %169 {offsets = [0, 0], sizes = [8, 384], strides = [1, 1]} : vector<8x512xf32> to vector<8x384xf32>
    %171 = arith.negf %170 : vector<8x384xf32>
    %172 = math.exp %171 : vector<8x384xf32>
    %cst_39 = arith.constant 1.000000e+00 : f32
    %173 = vector.broadcast %cst_39 : f32 to vector<8x384xf32>
    %174 = arith.addf %173, %172 : vector<8x384xf32>
    %175 = arith.divf %173, %174 : vector<8x384xf32>
    %176 = vector.extract_strided_slice %169 {offsets = [0, 384], sizes = [8, 128], strides = [1, 1]} : vector<8x512xf32> to vector<8x128xf32>
    %177 = math.tanh %176 : vector<8x128xf32>
    %178 = vector.extract_strided_slice %175 {offsets = [0, 0], sizes = [8, 128], strides = [1, 1]} : vector<8x384xf32> to vector<8x128xf32>
    %179 = vector.extract_strided_slice %175 {offsets = [0, 128], sizes = [8, 128], strides = [1, 1]} : vector<8x384xf32> to vector<8x128xf32>
    %180 = vector.extract_strided_slice %175 {offsets = [0, 256], sizes = [8, 128], strides = [1, 1]} : vector<8x384xf32> to vector<8x128xf32>
    %181 = arith.mulf %179, %157 : vector<8x128xf32>
    %182 = arith.mulf %178, %177 : vector<8x128xf32>
    %183 = arith.addf %181, %182 : vector<8x128xf32>
    %184 = math.tanh %183 : vector<8x128xf32>
    %185 = arith.mulf %180, %184 : vector<8x128xf32>
    %c0_40 = arith.constant 0 : index
    %c7 = arith.constant 7 : index
    %186 = vector.load %arg1[%c0_40, %c7] : memref<8x8xf32, #tpu.memory_space<vmem>>, vector<8x1xf32>
    %187 = vector.broadcast %186 : vector<8x1xf32> to vector<8x512xf32>
    %188 = vector.broadcast %0 : vector<1x512xf32> to vector<8x512xf32>
    %189 = arith.mulf %187, %188 : vector<8x512xf32>
    %190 = vector.broadcast %1 : vector<1x512xf32> to vector<8x512xf32>
    %191 = arith.addf %189, %190 : vector<8x512xf32>
    %192 = vector.extract_strided_slice %185 {offsets = [0, 0], sizes = [8, 32], strides = [1, 1]} : vector<8x128xf32> to vector<8x32xf32>
    %c0_41 = arith.constant 0 : index
    %c0_42 = arith.constant 0 : index
    %193 = vector.load %arg3[%c0_41, %c0_42] : memref<32x512xf32, #tpu.memory_space<vmem>>, vector<32x512xf32>
    %cst_43 = arith.constant dense<0.000000e+00> : vector<8x512xf32>
    %194 = tpu.matmul %192, %193, %cst_43 {dimension_numbers = #tpu.dot_dimension_numbers<[1], [0], [0], [1], [0, 0, 1, 1], [], []>} : vector<8x32xf32>, vector<32x512xf32>, vector<8x512xf32> -> vector<8x512xf32>
    %195 = arith.addf %191, %194 : vector<8x512xf32>
    %196 = vector.extract_strided_slice %195 {offsets = [0, 0], sizes = [8, 384], strides = [1, 1]} : vector<8x512xf32> to vector<8x384xf32>
    %197 = arith.negf %196 : vector<8x384xf32>
    %198 = math.exp %197 : vector<8x384xf32>
    %cst_44 = arith.constant 1.000000e+00 : f32
    %199 = vector.broadcast %cst_44 : f32 to vector<8x384xf32>
    %200 = arith.addf %199, %198 : vector<8x384xf32>
    %201 = arith.divf %199, %200 : vector<8x384xf32>
    %202 = vector.extract_strided_slice %195 {offsets = [0, 384], sizes = [8, 128], strides = [1, 1]} : vector<8x512xf32> to vector<8x128xf32>
    %203 = math.tanh %202 : vector<8x128xf32>
    %204 = vector.extract_strided_slice %201 {offsets = [0, 0], sizes = [8, 128], strides = [1, 1]} : vector<8x384xf32> to vector<8x128xf32>
    %205 = vector.extract_strided_slice %201 {offsets = [0, 128], sizes = [8, 128], strides = [1, 1]} : vector<8x384xf32> to vector<8x128xf32>
    %206 = vector.extract_strided_slice %201 {offsets = [0, 256], sizes = [8, 128], strides = [1, 1]} : vector<8x384xf32> to vector<8x128xf32>
    %207 = arith.mulf %205, %183 : vector<8x128xf32>
    %208 = arith.mulf %204, %203 : vector<8x128xf32>
    %209 = arith.addf %207, %208 : vector<8x128xf32>
    %210 = math.tanh %209 : vector<8x128xf32>
    %211 = arith.mulf %206, %210 : vector<8x128xf32>
    %c0_45 = arith.constant 0 : index
    %c0_46 = arith.constant 0 : index
    %212 = vector.load %arg5[%c0_45, %c0_46] : memref<1x128xf32, #tpu.memory_space<vmem>>, vector<1x128xf32>
    %213 = vector.broadcast %212 : vector<1x128xf32> to vector<8x128xf32>
    %214 = arith.mulf %211, %213 : vector<8x128xf32>
    %cst_47 = arith.constant dense<0.000000e+00> : vector<8xf32>
    %215 = vector.multi_reduction <add>, %214, %cst_47 [1] : vector<8x128xf32> to vector<8xf32>
    %216 = vector.shape_cast %215 : vector<8xf32> to vector<8x1xf32>
    %c0_48 = arith.constant 0 : index
    %217 = memref.load %arg6[%c0_48] : memref<1xf32, #tpu.memory_space<smem>>
    %218 = vector.broadcast %217 : f32 to vector<8x1xf32>
    %219 = arith.addf %216, %218 : vector<8x1xf32>
    %220 = vector.shape_cast %219 : vector<8x1xf32> to vector<8x1xf32>
    %221 = vector.broadcast %220 : vector<8x1xf32> to vector<8x128xf32>
    %c0_49 = arith.constant 0 : index
    %c0_50 = arith.constant 0 : index
    %222 = vector.load %arg7[%c0_49, %c0_50] : memref<8x128xf32, #tpu.memory_space<vmem>>, vector<8x128xf32>
    tpu.vector_store %arg7[%c0_49, %c0_50], %221 {strides = array<i32>} : memref<8x128xf32, #tpu.memory_space<vmem>>, vector<8x128xf32>,
    return
  }
  func.func @transform_0(%arg0: i32) -> (i32, i32) {
    %c0_i32 = arith.constant 0 : i32
    %c0_i32_0 = arith.constant 0 : i32
    return %arg0, %c0_i32 : i32, i32
  }
  func.func @transform_1(%arg0: i32) -> (i32, i32) {
    %c0_i32 = arith.constant 0 : i32
    %c0_i32_0 = arith.constant 0 : i32
    %c0_i32_1 = arith.constant 0 : i32
    return %c0_i32, %c0_i32_0 : i32, i32
  }
  func.func @transform_2(%arg0: i32) -> (i32, i32) {
    %c0_i32 = arith.constant 0 : i32
    %c0_i32_0 = arith.constant 0 : i32
    %c0_i32_1 = arith.constant 0 : i32
    return %c0_i32, %c0_i32_0 : i32, i32
  }
  func.func @transform_3(%arg0: i32) -> (i32, i32) {
    %c0_i32 = arith.constant 0 : i32
    %c0_i32_0 = arith.constant 0 : i32
    %c0_i32_1 = arith.constant 0 : i32
    return %c0_i32, %c0_i32_0 : i32, i32
  }
  func.func @transform_4(%arg0: i32) -> (i32, i32) {
    %c0_i32 = arith.constant 0 : i32
    %c0_i32_0 = arith.constant 0 : i32
    %c0_i32_1 = arith.constant 0 : i32
    return %c0_i32, %c0_i32_0 : i32, i32
  }
  func.func @transform_5(%arg0: i32) -> i32 {
    %c0_i32 = arith.constant 0 : i32
    %c0_i32_0 = arith.constant 0 : i32
    return %c0_i32 : i32
  }
  func.func @transform_6(%arg0: i32) -> (i32, i32) {
    %c0_i32 = arith.constant 0 : i32
    %c0_i32_0 = arith.constant 0 : i32
    return %arg0, %c0_i32 : i32, i32
  }
}

</mosaic_0001>

<llo_original>
// kernel: tpu_custom_call.1
$region0: #{tpu_custom_call.1}
  #allocation0 [shape = 'u32[]', space=smem, size = 0x4, offset = 0x4, fixed_abs, tag = 'smem constant byte address 0x4 - core index']
  #allocation1 [shape = 'u32[72,128]{1,0:T(1,128)}', space=vmem, size = 0x9000, scoped, tag = 'internal scratch']
  #allocation2 [shape = 'f32[1]{0:T(128)S(6)}', space=smem, size = 0x200, scoped, tag = 'scoped memory for tpu_custom_call.1']
  %s0 = inlined_call_operand.vmem [shape: f32[16,8], index: 0, kind: input, shape index: {}]
  %s1 = inlined_call_operand.vmem [shape: f32[1,512], index: 1, kind: input, shape index: {}]
  %s2 = inlined_call_operand.hbm [shape: f32[32,512], index: 2, kind: input, shape index: {}]
  %s3 = inlined_call_operand.vmem [shape: f32[1,512], index: 3, kind: input, shape index: {}]
  %s4 = inlined_call_operand.vmem [shape: f32[1,128], index: 4, kind: input, shape index: {}]
  %s5 = inlined_call_operand.<no memory space> [shape: f32[1], index: 5, kind: input, shape index: {}]
  %s6 = inlined_call_operand.hbm [shape: f32[16,128], index: 6, kind: output, shape index: {}]
  %s7 = sld [smem:[#allocation0]]
  $region61: #{tpu_custom_call.1} parent=0
    _
  %s9 = ssub.s32 1, %s7
  %s10 = scalar_select 0, %s9, %s7
  %11 = sst [smem:[#allocation2]] %s5
  $region1: #{tpu_custom_call.1} parent=0
    #allocation3 [shape = 'u8[65536]{0}', space=vmem, size = 0x10000, scoped, tag = 'input window, operand 2, single buffered']
    #allocation4 [shape = 's32[2]{0}', space=sflag, size = 0x8, scoped, tag = 'scoped memory for tpu_custom_call.1']
    #allocation5 [shape = 's32[2]{0}', space=sflag, size = 0x8, scoped, tag = 'scoped memory for tpu_custom_call.1']
    #allocation6 [shape = 'u8[8192]{0}', space=vmem, size = 0x2000, scoped, tag = 'output window, operand 0']
    %12 = vsyncpa [#allocation4], 0
    %13 = vsyncpa [#allocation5], 0
    %s14 = scalar_lea.sflag [#allocation5], 1
    %15 = vsyncpa %s14, 0
    loop: start=0, step=1, limit=4
    $region2: #{tpu_custom_call.1} parent=1 // loop_pre_header
      _
    $region3: #{tpu_custom_call.1} parent=1 // loop_header
      %s17 = sphi 0, %s21
      %p18 = scmp.ge.s32.totalorder %s17, 4
      %s27 = sphi 0, %s29
      %s30 = sphi 0, %s27
      %s31 = sphi 0, %s30
      %s47 = sphi 0, %s31
      %s51 = sphi 0, %s51
      %s53 = sphi 0, %s51
      %s54 = sphi 0, %s53
      %s68 = sphi 0, %s54
      %s72 = sphi 0, %s72
      %s74 = sphi 0, %s72
      %s75 = sphi 0, %s74
      %s89 = sphi 0, %s75
      %s93 = sphi 0, %s93
      %s95 = sphi 0, %s93
      %s96 = sphi 0, %s95
      %s110 = sphi 0, %s96
      %s114 = sphi 0, %s114
      %s116 = sphi 0, %s114
      %s117 = sphi 0, %s116
      %s131 = sphi 0, %s117
      %s135 = sphi 0, %s135
      %s137 = sphi 0, %s135
      %s138 = sphi 0, %s137
      %s152 = sphi 0, %s138
      %s158 = sphi 0, %s160
      %s161 = sphi 0, %s158
      %s162 = sphi 0, %s161
      %s178 = sphi 0, %s162
    $region4: #{tpu_custom_call.1} parent=1 // loop_header_branch
      %20 = sbr.rel (%p18) target = $region8
    $region5: #{tpu_custom_call.1} parent=1 // loop_body
      %s22 = ssub.s32 %s17, 1
      %s23 = ssub.s32 %s17, 2
      %s24 = sadd.s32 %s17, 1
      %s25 = ssub.s32 %s17, %s24
      %p26 = scmp.eq.s32.totalorder %s25, 0
      %s28 = sadd.s32 %s27, 1
      %s29 = scalar_select %p26, %s27, %s28
      %p32 = pneg %p26
      %p33 = scmp.eq.s32.totalorder %s17, 1
      %p34 = por %p32, %p33
      %p35 = scmp.ne.s32.totalorder %s27, %s30
      %p36 = scmp.eq.s32.totalorder %s17, 0
      %p37 = por %p35, %p36
      %p38 = scmp.ne.s32.totalorder %s27, %s30
      %p39 = scmp.eq.s32.totalorder %s22, 1
      %p40 = por %p38, %p39
      %p41 = scmp.ne.s32.totalorder %s30, %s31
      %p42 = scmp.eq.s32.totalorder %s22, 0
      %p43 = por %p41, %p42
      %p44 = scmp.ne.s32.totalorder %s30, %s31
      %p45 = scmp.eq.s32.totalorder %s23, 1
      %p46 = por %p44, %p45
      %p48 = scmp.ne.s32.totalorder %s31, %s47
      %p49 = scmp.eq.s32.totalorder %s23, 0
      %p50 = por %p48, %p49
      %s52 = sadd.s32 %s51, 1
      %p55 = scmp.eq.s32.totalorder %s17, 1
      %p56 = scmp.ne.s32.totalorder %s51, %s53
      %p57 = scmp.eq.s32.totalorder %s17, 0
      %p58 = por %p56, %p57
      %p59 = scmp.ne.s32.totalorder %s51, %s53
      %p60 = scmp.eq.s32.totalorder %s22, 1
      %p61 = por %p59, %p60
      %p62 = scmp.ne.s32.totalorder %s53, %s54
      %p63 = scmp.eq.s32.totalorder %s22, 0
      %p64 = por %p62, %p63
      %p65 = scmp.ne.s32.totalorder %s53, %s54
      %p66 = scmp.eq.s32.totalorder %s23, 1
      %p67 = por %p65, %p66
      %p69 = scmp.ne.s32.totalorder %s54, %s68
      %p70 = scmp.eq.s32.totalorder %s23, 0
      %p71 = por %p69, %p70
      %s73 = sadd.s32 %s72, 1
      %p76 = scmp.eq.s32.totalorder %s17, 1
      %p77 = scmp.ne.s32.totalorder %s72, %s74
      %p78 = scmp.eq.s32.totalorder %s17, 0
      %p79 = por %p77, %p78
      %p80 = scmp.ne.s32.totalorder %s72, %s74
      %p81 = scmp.eq.s32.totalorder %s22, 1
      %p82 = por %p80, %p81
      %p83 = scmp.ne.s32.totalorder %s74, %s75
      %p84 = scmp.eq.s32.totalorder %s22, 0
      %p85 = por %p83, %p84
      %p86 = scmp.ne.s32.totalorder %s74, %s75
      %p87 = scmp.eq.s32.totalorder %s23, 1
      %p88 = por %p86, %p87
      %p90 = scmp.ne.s32.totalorder %s75, %s89
      %p91 = scmp.eq.s32.totalorder %s23, 0
      %p92 = por %p90, %p91
      %s94 = sadd.s32 %s93, 1
      %p97 = scmp.eq.s32.totalorder %s17, 1
      %p98 = scmp.ne.s32.totalorder %s93, %s95
      %p99 = scmp.eq.s32.totalorder %s17, 0
      %p100 = por %p98, %p99
      %p101 = scmp.ne.s32.totalorder %s93, %s95
      %p102 = scmp.eq.s32.totalorder %s22, 1
      %p103 = por %p101, %p102
      %p104 = scmp.ne.s32.totalorder %s95, %s96
      %p105 = scmp.eq.s32.totalorder %s22, 0
      %p106 = por %p104, %p105
      %p107 = scmp.ne.s32.totalorder %s95, %s96
      %p108 = scmp.eq.s32.totalorder %s23, 1
      %p109 = por %p107, %p108
      %p111 = scmp.ne.s32.totalorder %s96, %s110
      %p112 = scmp.eq.s32.totalorder %s23, 0
      %p113 = por %p111, %p112
      %s115 = sadd.s32 %s114, 1
      %p118 = scmp.eq.s32.totalorder %s17, 1
      %p119 = scmp.ne.s32.totalorder %s114, %s116
      %p120 = scmp.eq.s32.totalorder %s17, 0
      %p121 = por %p119, %p120
      %p122 = scmp.ne.s32.totalorder %s114, %s116
      %p123 = scmp.eq.s32.totalorder %s22, 1
      %p124 = por %p122, %p123
      %p125 = scmp.ne.s32.totalorder %s116, %s117
      %p126 = scmp.eq.s32.totalorder %s22, 0
      %p127 = por %p125, %p126
      %p128 = scmp.ne.s32.totalorder %s116, %s117
      %p129 = scmp.eq.s32.totalorder %s23, 1
      %p130 = por %p128, %p129
      %p132 = scmp.ne.s32.totalorder %s117, %s131
      %p133 = scmp.eq.s32.totalorder %s23, 0
      %p134 = por %p132, %p133
      %s136 = sadd.s32 %s135, 1
      %p139 = scmp.eq.s32.totalorder %s17, 1
      %p140 = scmp.ne.s32.totalorder %s135, %s137
      %p141 = scmp.eq.s32.totalorder %s17, 0
      %p142 = por %p140, %p141
      %p143 = scmp.ne.s32.totalorder %s135, %s137
      %p144 = scmp.eq.s32.totalorder %s22, 1
      %p145 = por %p143, %p144
      %p146 = scmp.ne.s32.totalorder %s137, %s138
      %p147 = scmp.eq.s32.totalorder %s22, 0
      %p148 = por %p146, %p147
      %p149 = scmp.ne.s32.totalorder %s137, %s138
      %p150 = scmp.eq.s32.totalorder %s23, 1
      %p151 = por %p149, %p150
      %p153 = scmp.ne.s32.totalorder %s138, %s152
      %p154 = scmp.eq.s32.totalorder %s23, 0
      %p155 = por %p153, %p154
      %s156 = ssub.s32 %s17, %s24
      %p157 = scmp.eq.s32.totalorder %s156, 0
      %s159 = sadd.s32 %s158, 1
      %s160 = scalar_select %p157, %s158, %s159
      %p163 = pneg %p157
      %p164 = scmp.eq.s32.totalorder %s17, 1
      %p165 = por %p163, %p164
      %p166 = scmp.ne.s32.totalorder %s158, %s161
      %p167 = scmp.eq.s32.totalorder %s17, 0
      %p168 = por %p166, %p167
      %p169 = scmp.ne.s32.totalorder %s158, %s161
      %p170 = scmp.eq.s32.totalorder %s22, 1
      %p171 = por %p169, %p170
      %p172 = scmp.ne.s32.totalorder %s161, %s162
      %p173 = scmp.eq.s32.totalorder %s22, 0
      %p174 = por %p172, %p173
      %p175 = scmp.ne.s32.totalorder %s161, %s162
      %p176 = scmp.eq.s32.totalorder %s23, 1
      %p177 = por %p175, %p176
      %p179 = scmp.ne.s32.totalorder %s162, %s178
      %p180 = scmp.eq.s32.totalorder %s23, 0
      %p181 = por %p179, %p180
      %p182 = scmp.le.s32.totalorder 1, %s17
      %p183 = scmp.lt.s32.totalorder %s17, 3
      %p184 = pnand %p182, %p183
      %p185 = pneg %p184
      // Predicated region
      $region9: #{tpu_custom_call.1} parent=5 // pred_check
        _
      $region10: #{tpu_custom_call.1} parent=5 // pred_check_branch
        %187 = sbr.rel (%p184) target = $region12
      $region11: #{tpu_custom_call.1} parent=5 // pred_region
        %s188 = ssub.s32 %s17, 1
        // Predicated region
        $region13: #{tpu_custom_call.1} parent=11 // pred_check
          %p189 = pneg %p64
        $region14: #{tpu_custom_call.1} parent=11 // pred_check_branch
          %191 = sbr.rel (%p189) target = $region16
        $region15: #{tpu_custom_call.1} parent=11 // pred_region
          _
        $region16: #{tpu_custom_call.1} parent=11 // pred_fallthru
          _
        // Predicated region
        $region17: #{tpu_custom_call.1} parent=11 // pred_check
          %p192 = pneg %p85
        $region18: #{tpu_custom_call.1} parent=11 // pred_check_branch
          %194 = sbr.rel (%p192) target = $region20
        $region19: #{tpu_custom_call.1} parent=11 // pred_region
          %196 = vsyncadd [#allocation4], 0
          %s197 = sshll.u32 %s2, 4
          %s198 = int_to_ptr.hbm [resolvable:$true] %s197
          %s199 = sshll.u32 [#allocation3], 4
          %s200 = int_to_ptr.vmem [resolvable:$true] %s199
          %205 = dma.hbm_to_vmem [thread:$0]  %s198, 2048, %s200, [#allocation4], 512, 512, 32
        $region20: #{tpu_custom_call.1} parent=11 // pred_fallthru
          _
        // Predicated region
        $region21: #{tpu_custom_call.1} parent=11 // pred_check
          %p206 = pneg %p106
        $region22: #{tpu_custom_call.1} parent=11 // pred_check_branch
          %208 = sbr.rel (%p206) target = $region24
        $region23: #{tpu_custom_call.1} parent=11 // pred_region
          _
        $region24: #{tpu_custom_call.1} parent=11 // pred_fallthru
          _
        // Predicated region
        $region25: #{tpu_custom_call.1} parent=11 // pred_check
          %p209 = pneg %p127
        $region26: #{tpu_custom_call.1} parent=11 // pred_check_branch
          %211 = sbr.rel (%p209) target = $region28
        $region27: #{tpu_custom_call.1} parent=11 // pred_region
          _
        $region28: #{tpu_custom_call.1} parent=11 // pred_fallthru
          _
        // Predicated region
        $region29: #{tpu_custom_call.1} parent=11 // pred_check
          %p212 = pneg %p148
        $region30: #{tpu_custom_call.1} parent=11 // pred_check_branch
          %214 = sbr.rel (%p212) target = $region32
        $region31: #{tpu_custom_call.1} parent=11 // pred_region
          _
        $region32: #{tpu_custom_call.1} parent=11 // pred_fallthru
          _
      $region12: #{tpu_custom_call.1} parent=5 // pred_fallthru
        _
      %p215 = scmp.lt.s32.totalorder %s17, 2
      // Predicated region
      $region33: #{tpu_custom_call.1} parent=5 // pred_check
        %p216 = pneg %p215
      $region34: #{tpu_custom_call.1} parent=5 // pred_check_branch
        %218 = sbr.rel (%p216) target = $region36
      $region35: #{tpu_custom_call.1} parent=5 // pred_region
        // Predicated region
        $region37: #{tpu_custom_call.1} parent=35 // pred_check
          %p219 = pneg %p37
        $region38: #{tpu_custom_call.1} parent=35 // pred_check_branch
          %221 = sbr.rel (%p219) target = $region40
        $region39: #{tpu_custom_call.1} parent=35 // pred_region
          %p222 = scmp.lt.s32.totalorder %s17, 1
          %s223 = scalar_select %p222, %s17, 1
          %s224 = smul.addr %s223, 8
          %s225 = scalar_lea.vmem %s0, %s224
        $region40: #{tpu_custom_call.1} parent=35 // pred_fallthru
          _
      $region36: #{tpu_custom_call.1} parent=5 // pred_fallthru
        _
      %p226 = scmp.le.s32.totalorder 1, %s17
      %p227 = scmp.lt.s32.totalorder %s17, 3
      %p228 = pnand %p226, %p227
      %p229 = pneg %p228
      // Predicated region
      $region41: #{tpu_custom_call.1} parent=5 // pred_check
        _
      $region42: #{tpu_custom_call.1} parent=5 // pred_check_branch
        %231 = sbr.rel (%p228) target = $region44
      $region43: #{tpu_custom_call.1} parent=5 // pred_region
        %s232 = ssub.s32 %s17, 1
        // Predicated region
        $region45: #{tpu_custom_call.1} parent=43 // pred_check
          %p233 = pneg %p85
        $region46: #{tpu_custom_call.1} parent=43 // pred_check_branch
          %235 = sbr.rel (%p233) target = $region48
        $region47: #{tpu_custom_call.1} parent=43 // pred_region
          %237 = dma.done [#allocation4], 2048
        $region48: #{tpu_custom_call.1} parent=43 // pred_fallthru
          _
        %p238 = scmp.lt.s32.totalorder %s22, 1
        %s239 = scalar_select %p238, %s22, 1
        %s240 = smul.addr %s239, 8
        %s241 = scalar_lea.vmem %s0, %s240
        %p242 = pneg %p43
        %p243 = pneg %p40
        %p244 = pneg %p64
        %p245 = pneg %p61
        %p246 = pneg %p85
        %p247 = pneg %p82
        %p248 = pneg %p106
        %p249 = pneg %p103
        %p250 = pneg %p127
        %p251 = pneg %p124
        %p252 = pneg %p148
        %p253 = pneg %p145
        %p254 = pneg %p174
        %p255 = pneg %p171
        %s256 = sand.u32 %s161, 1
        %s257 = scalar_lea.sflag [#allocation5], %s256
        %s258 = sand.u32 %s161, 1
        %s259 = smul.addr %s258, 8
        %s260 = scalar_lea.vmem [#allocation6], %s259
        %p261 = scmp.lt.s32.totalorder %s22, 1
        %s262 = scalar_select %p261, %s22, 1
        %s263 = smul.addr %s262, 8
        %s264 = scalar_lea.vmem %s0, %s263
        %v265 = vld [vmem:[%s1] sm:$0xf]
        %v266 = vld [vmem:[%s3] sm:$0xf]
        %v267 = vld [vmem:[%s264] sm:$0xff]
        %269 = vset.pattern.permute.xlu0 0
        %270 = vperm.xlu0 %269, %v267
        %v271 = vpop.permute.xlu0 %270
        %v274 = vperm.slane %v265, 0
        %v275 = vperm.slane %v265, 1
        %v276 = vperm.slane %v265, 2
        %v277 = vperm.slane %v265, 3
        %v282 = vmul.f32 %v271, %v274
        %v283 = vmul.f32 %v271, %v275
        %v284 = vmul.f32 %v271, %v276
        %v285 = vmul.f32 %v271, %v277
        %v287 = vperm.slane %v266, 0
        %v288 = vperm.slane %v266, 1
        %v289 = vperm.slane %v266, 2
        %v290 = vperm.slane %v266, 3
        %v295 = vadd.f32 %v282, %v287
        %v296 = vadd.f32 %v283, %v288
        %v297 = vadd.f32 %v284, %v289
        %v298 = vadd.f32 %v285, %v290
        %v299 = vld [vmem:[#allocation3] sm:$0xff]
        %v300 = vld [vmem:[#allocation3 + $0x8] sm:$0xff]
        %v301 = vld [vmem:[#allocation3 + $0x10] sm:$0xff]
        %v302 = vld [vmem:[#allocation3 + $0x18] sm:$0xff]
        %v303 = vld [vmem:[#allocation3 + $0x20] sm:$0xff]
        %v304 = vld [vmem:[#allocation3 + $0x28] sm:$0xff]
        %v305 = vld [vmem:[#allocation3 + $0x30] sm:$0xff]
        %v306 = vld [vmem:[#allocation3 + $0x38] sm:$0xff]
        %v307 = vld [vmem:[#allocation3 + $0x40] sm:$0xff]
        %v308 = vld [vmem:[#allocation3 + $0x48] sm:$0xff]
        %v309 = vld [vmem:[#allocation3 + $0x50] sm:$0xff]
        %v310 = vld [vmem:[#allocation3 + $0x58] sm:$0xff]
        %v311 = vld [vmem:[#allocation3 + $0x60] sm:$0xff]
        %v312 = vld [vmem:[#allocation3 + $0x68] sm:$0xff]
        %v313 = vld [vmem:[#allocation3 + $0x70] sm:$0xff]
        %v314 = vld [vmem:[#allocation3 + $0x78] sm:$0xff]
        %vm315 = vcmask 261120
        %v317 = vsel %vm315, 0.0, 0
        %319 = vmatpush.msra.mxu0 0.0
        %320 = vmatpush.msra.mxu0 0.0
        %321 = vmatpush.msra.mxu0 0.0
        %322 = vmatpush.msra.mxu0 0.0
        %323 = vmatpush.msra.mxu0 0.0
        %324 = vmatpush.msra.mxu0 0.0
        %325 = vmatpush.msra.mxu0 0.0
        %326 = vmatpush.msra.mxu0 0.0
        %327 = vmatpush.msra.mxu0 0.0
        %328 = vmatpush.msra.mxu0 0.0
        %329 = vmatpush.msra.mxu0 0.0
        %330 = vmatpush.msra.mxu0 0.0
        %331 = vmatpush.msra.mxu0 %v311
        %332 = vmatpush.msra.mxu0 %v307
        %333 = vmatpush.msra.mxu0 %v303
        %334 = vmatpush.msra.mxu0 %v299
        %335 = vmatmul.f32.gmra.mxu0 %v317
        %v336 = vpop.f32.mrf.mxu0
        %v337 = vadd.f32 0.0, %v336
        %338 = vdwg.mxu0
        %339 = vmatpush.msra.mxu0 0.0
        %340 = vmatpush.msra.mxu0 0.0
        %341 = vmatpush.msra.mxu0 0.0
        %342 = vmatpush.msra.mxu0 0.0
        %343 = vmatpush.msra.mxu0 0.0
        %344 = vmatpush.msra.mxu0 0.0
        %345 = vmatpush.msra.mxu0 0.0
        %346 = vmatpush.msra.mxu0 0.0
        %347 = vmatpush.msra.mxu0 0.0
        %348 = vmatpush.msra.mxu0 0.0
        %349 = vmatpush.msra.mxu0 0.0
        %350 = vmatpush.msra.mxu0 0.0
        %351 = vmatpush.msra.mxu0 %v312
        %352 = vmatpush.msra.mxu0 %v308
        %353 = vmatpush.msra.mxu0 %v304
        %354 = vmatpush.msra.mxu0 %v300
        %355 = vmatmul.f32.gmra.mxu0 %v317
        %v356 = vpop.f32.mrf.mxu0
        %v357 = vadd.f32 0.0, %v356
        %358 = vdwg.mxu0
        %359 = vmatpush.msra.mxu0 0.0
        %360 = vmatpush.msra.mxu0 0.0
        %361 = vmatpush.msra.mxu0 0.0
        %362 = vmatpush.msra.mxu0 0.0
        %363 = vmatpush.msra.mxu0 0.0
        %364 = vmatpush.msra.mxu0 0.0
        %365 = vmatpush.msra.mxu0 0.0
        %366 = vmatpush.msra.mxu0 0.0
        %367 = vmatpush.msra.mxu0 0.0
        %368 = vmatpush.msra.mxu0 0.0
        %369 = vmatpush.msra.mxu0 0.0
        %370 = vmatpush.msra.mxu0 0.0
        %371 = vmatpush.msra.mxu0 %v313
        %372 = vmatpush.msra.mxu0 %v309
        %373 = vmatpush.msra.mxu0 %v305
        %374 = vmatpush.msra.mxu0 %v301
        %375 = vmatmul.f32.gmra.mxu0 %v317
        %v376 = vpop.f32.mrf.mxu0
        %v377 = vadd.f32 0.0, %v376
        %378 = vdwg.mxu0
        %379 = vmatpush.msra.mxu0 0.0
        %380 = vmatpush.msra.mxu0 0.0
        %381 = vmatpush.msra.mxu0 0.0
        %382 = vmatpush.msra.mxu0 0.0
        %383 = vmatpush.msra.mxu0 0.0
        %384 = vmatpush.msra.mxu0 0.0
        %385 = vmatpush.msra.mxu0 0.0
        %386 = vmatpush.msra.mxu0 0.0
        %387 = vmatpush.msra.mxu0 0.0
        %388 = vmatpush.msra.mxu0 0.0
        %389 = vmatpush.msra.mxu0 0.0
        %390 = vmatpush.msra.mxu0 0.0
        %391 = vmatpush.msra.mxu0 %v314
        %392 = vmatpush.msra.mxu0 %v310
        %393 = vmatpush.msra.mxu0 %v306
        %394 = vmatpush.msra.mxu0 %v302
        %395 = vmatmul.f32.gmra.mxu0 %v317
        %v396 = vpop.f32.mrf.mxu0
        %v397 = vadd.f32 0.0, %v396
        %398 = vdwg.mxu0
        %v399 = vadd.f32 %v295, %v337
        %v400 = vadd.f32 %v296, %v357
        %v401 = vadd.f32 %v297, %v377
        %v402 = vadd.f32 %v298, %v397
        %v403 = vxor.u32 %v399, 2147483648
        %v404 = vxor.u32 %v400, 2147483648
        %v405 = vxor.u32 %v401, 2147483648
        %v406 = vmul.f32 %v403, 1.442695
        %v407 = vpow.pop %v406
        %v408 = vmul.f32 %v404, 1.442695
        %v409 = vpow.pop %v408
        %v410 = vmul.f32 %v405, 1.442695
        %v411 = vpow.pop %v410
        %v412 = vadd.f32 %v407, 1.0
        %v413 = vadd.f32 %v409, 1.0
        %v414 = vadd.f32 %v411, 1.0
        %v415 = vrcp.pop %v412
        %v416 = vmul.f32 %v412, %v415
        %v417 = vsub.f32 1.0, %v416
        %v418 = vmul.f32 %v415, %v417
        %v419 = vadd.f32 %v415, %v418
        %vm420 = vweird.f32 %v412
        %vm421 = vweird.f32 %v415
        %vm422 = vmor %vm420, %vm421
        %v423 = vsel %vm422, %v415, %v419
        %v424 = vand.u32 2147483647, %v412
        %vm425 = vcmp.eq.f32.partialorder %v424, 8.507059e+37
        %v426 = vand.u32 %v412, 2147483648
        %v427 = vor.u32 1.1754944e-38, %v426
        %v428 = vsel %vm425, %v427, %v423
        %v429 = vmul.f32 1.0, %v428
        %v430 = vrcp.pop %v413
        %v431 = vmul.f32 %v413, %v430
        %v432 = vsub.f32 1.0, %v431
        %v433 = vmul.f32 %v430, %v432
        %v434 = vadd.f32 %v430, %v433
        %vm435 = vweird.f32 %v413
        %vm436 = vweird.f32 %v430
        %vm437 = vmor %vm435, %vm436
        %v438 = vsel %vm437, %v430, %v434
        %v439 = vand.u32 2147483647, %v413
        %vm440 = vcmp.eq.f32.partialorder %v439, 8.507059e+37
        %v441 = vand.u32 %v413, 2147483648
        %v442 = vor.u32 1.1754944e-38, %v441
        %v443 = vsel %vm440, %v442, %v438
        %v444 = vmul.f32 1.0, %v443
        %v445 = vrcp.pop %v414
        %v446 = vmul.f32 %v414, %v445
        %v447 = vsub.f32 1.0, %v446
        %v448 = vmul.f32 %v445, %v447
        %v449 = vadd.f32 %v445, %v448
        %vm450 = vweird.f32 %v414
        %vm451 = vweird.f32 %v445
        %vm452 = vmor %vm450, %vm451
        %v453 = vsel %vm452, %v445, %v449
        %v454 = vand.u32 2147483647, %v414
        %vm455 = vcmp.eq.f32.partialorder %v454, 8.507059e+37
        %v456 = vand.u32 %v414, 2147483648
        %v457 = vor.u32 1.1754944e-38, %v456
        %v458 = vsel %vm455, %v457, %v453
        %v459 = vmul.f32 1.0, %v458
        %v460 = vtanh.pop %v402
        %v461 = vmul.f32 %v444, 0.0
        %v462 = vmul.f32 %v429, %v460
        %v463 = vadd.f32 %v461, %v462
        %v464 = vtanh.pop %v463
        %v465 = vmul.f32 %v459, %v464
        %466 = vset.pattern.permute.xlu0 1
        %467 = vperm.xlu0 %466, %v267
        %v468 = vpop.permute.xlu0 %467
        %v470 = vmul.f32 %v468, %v274
        %v471 = vmul.f32 %v468, %v275
        %v472 = vmul.f32 %v468, %v276
        %v473 = vmul.f32 %v468, %v277
        %v474 = vadd.f32 %v470, %v287
        %v475 = vadd.f32 %v471, %v288
        %v476 = vadd.f32 %v472, %v289
        %v477 = vadd.f32 %v473, %v290
        %v479 = vsel %vm315, %v465, 0
        %481 = vmatpush.msra.mxu0 0.0
        %482 = vmatpush.msra.mxu0 0.0
        %483 = vmatpush.msra.mxu0 0.0
        %484 = vmatpush.msra.mxu0 0.0
        %485 = vmatpush.msra.mxu0 0.0
        %486 = vmatpush.msra.mxu0 0.0
        %487 = vmatpush.msra.mxu0 0.0
        %488 = vmatpush.msra.mxu0 0.0
        %489 = vmatpush.msra.mxu0 0.0
        %490 = vmatpush.msra.mxu0 0.0
        %491 = vmatpush.msra.mxu0 0.0
        %492 = vmatpush.msra.mxu0 0.0
        %493 = vmatpush.msra.mxu0 %v311
        %494 = vmatpush.msra.mxu0 %v307
        %495 = vmatpush.msra.mxu0 %v303
        %496 = vmatpush.msra.mxu0 %v299
        %497 = vmatmul.f32.gmra.mxu0 %v479
        %v498 = vpop.f32.mrf.mxu0
        %v499 = vadd.f32 0.0, %v498
        %500 = vdwg.mxu0
        %501 = vmatpush.msra.mxu0 0.0
        %502 = vmatpush.msra.mxu0 0.0
        %503 = vmatpush.msra.mxu0 0.0
        %504 = vmatpush.msra.mxu0 0.0
        %505 = vmatpush.msra.mxu0 0.0
        %506 = vmatpush.msra.mxu0 0.0
        %507 = vmatpush.msra.mxu0 0.0
        %508 = vmatpush.msra.mxu0 0.0
        %509 = vmatpush.msra.mxu0 0.0
        %510 = vmatpush.msra.mxu0 0.0
        %511 = vmatpush.msra.mxu0 0.0
        %512 = vmatpush.msra.mxu0 0.0
        %513 = vmatpush.msra.mxu0 %v312
        %514 = vmatpush.msra.mxu0 %v308
        %515 = vmatpush.msra.mxu0 %v304
        %516 = vmatpush.msra.mxu0 %v300
        %517 = vmatmul.f32.gmra.mxu0 %v479
        %v518 = vpop.f32.mrf.mxu0
        %v519 = vadd.f32 0.0, %v518
        %520 = vdwg.mxu0
        %521 = vmatpush.msra.mxu0 0.0
        %522 = vmatpush.msra.mxu0 0.0
        %523 = vmatpush.msra.mxu0 0.0
        %524 = vmatpush.msra.mxu0 0.0
        %525 = vmatpush.msra.mxu0 0.0
        %526 = vmatpush.msra.mxu0 0.0
        %527 = vmatpush.msra.mxu0 0.0
        %528 = vmatpush.msra.mxu0 0.0
        %529 = vmatpush.msra.mxu0 0.0
        %530 = vmatpush.msra.mxu0 0.0
        %531 = vmatpush.msra.mxu0 0.0
        %532 = vmatpush.msra.mxu0 0.0
        %533 = vmatpush.msra.mxu0 %v313
        %534 = vmatpush.msra.mxu0 %v309
        %535 = vmatpush.msra.mxu0 %v305
        %536 = vmatpush.msra.mxu0 %v301
        %537 = vmatmul.f32.gmra.mxu0 %v479
        %v538 = vpop.f32.mrf.mxu0
        %v539 = vadd.f32 0.0, %v538
        %540 = vdwg.mxu0
        %541 = vmatpush.msra.mxu0 0.0
        %542 = vmatpush.msra.mxu0 0.0
        %543 = vmatpush.msra.mxu0 0.0
        %544 = vmatpush.msra.mxu0 0.0
        %545 = vmatpush.msra.mxu0 0.0
        %546 = vmatpush.msra.mxu0 0.0
        %547 = vmatpush.msra.mxu0 0.0
        %548 = vmatpush.msra.mxu0 0.0
        %549 = vmatpush.msra.mxu0 0.0
        %550 = vmatpush.msra.mxu0 0.0
        %551 = vmatpush.msra.mxu0 0.0
        %552 = vmatpush.msra.mxu0 0.0
        %553 = vmatpush.msra.mxu0 %v314
        %554 = vmatpush.msra.mxu0 %v310
        %555 = vmatpush.msra.mxu0 %v306
        %556 = vmatpush.msra.mxu0 %v302
        %557 = vmatmul.f32.gmra.mxu0 %v479
        %v558 = vpop.f32.mrf.mxu0
        %v559 = vadd.f32 0.0, %v558
        %560 = vdwg.mxu0
        %v561 = vadd.f32 %v474, %v499
        %v562 = vadd.f32 %v475, %v519
        %v563 = vadd.f32 %v476, %v539
        %v564 = vadd.f32 %v477, %v559
        %v565 = vxor.u32 %v561, 2147483648
        %v566 = vxor.u32 %v562, 2147483648
        %v567 = vxor.u32 %v563, 2147483648
        %v568 = vmul.f32 %v565, 1.442695
        %v569 = vpow.pop %v568
        %v570 = vmul.f32 %v566, 1.442695
        %v571 = vpow.pop %v570
        %v572 = vmul.f32 %v567, 1.442695
        %v573 = vpow.pop %v572
        %v574 = vadd.f32 %v569, 1.0
        %v575 = vadd.f32 %v571, 1.0
        %v576 = vadd.f32 %v573, 1.0
        %v577 = vrcp.pop %v574
        %v578 = vmul.f32 %v574, %v577
        %v579 = vsub.f32 1.0, %v578
        %v580 = vmul.f32 %v577, %v579
        %v581 = vadd.f32 %v577, %v580
        %vm582 = vweird.f32 %v574
        %vm583 = vweird.f32 %v577
        %vm584 = vmor %vm582, %vm583
        %v585 = vsel %vm584, %v577, %v581
        %v586 = vand.u32 2147483647, %v574
        %vm587 = vcmp.eq.f32.partialorder %v586, 8.507059e+37
        %v588 = vand.u32 %v574, 2147483648
        %v589 = vor.u32 1.1754944e-38, %v588
        %v590 = vsel %vm587, %v589, %v585
        %v591 = vmul.f32 1.0, %v590
        %v592 = vrcp.pop %v575
        %v593 = vmul.f32 %v575, %v592
        %v594 = vsub.f32 1.0, %v593
        %v595 = vmul.f32 %v592, %v594
        %v596 = vadd.f32 %v592, %v595
        %vm597 = vweird.f32 %v575
        %vm598 = vweird.f32 %v592
        %vm599 = vmor %vm597, %vm598
        %v600 = vsel %vm599, %v592, %v596
        %v601 = vand.u32 2147483647, %v575
        %vm602 = vcmp.eq.f32.partialorder %v601, 8.507059e+37
        %v603 = vand.u32 %v575, 2147483648
        %v604 = vor.u32 1.1754944e-38, %v603
        %v605 = vsel %vm602, %v604, %v600
        %v606 = vmul.f32 1.0, %v605
        %v607 = vrcp.pop %v576
        %v608 = vmul.f32 %v576, %v607
        %v609 = vsub.f32 1.0, %v608
        %v610 = vmul.f32 %v607, %v609
        %v611 = vadd.f32 %v607, %v610
        %vm612 = vweird.f32 %v576
        %vm613 = vweird.f32 %v607
        %vm614 = vmor %vm612, %vm613
        %v615 = vsel %vm614, %v607, %v611
        %v616 = vand.u32 2147483647, %v576
        %vm617 = vcmp.eq.f32.partialorder %v616, 8.507059e+37
        %v618 = vand.u32 %v576, 2147483648
        %v619 = vor.u32 1.1754944e-38, %v618
        %v620 = vsel %vm617, %v619, %v615
        %v621 = vmul.f32 1.0, %v620
        %v622 = vtanh.pop %v564
        %v623 = vmul.f32 %v606, %v463
        %v624 = vmul.f32 %v591, %v622
        %v625 = vadd.f32 %v623, %v624
        %v626 = vtanh.pop %v625
        %v627 = vmul.f32 %v621, %v626
        %628 = vset.pattern.permute.xlu0 2
        %629 = vperm.xlu0 %628, %v267
        %v630 = vpop.permute.xlu0 %629
        %v632 = vmul.f32 %v630, %v274
        %v633 = vmul.f32 %v630, %v275
        %v634 = vmul.f32 %v630, %v276
        %v635 = vmul.f32 %v630, %v277
        %v636 = vadd.f32 %v632, %v287
        %v637 = vadd.f32 %v633, %v288
        %v638 = vadd.f32 %v634, %v289
        %v639 = vadd.f32 %v635, %v290
        %v641 = vsel %vm315, %v627, 0
        %643 = vmatpush.msra.mxu0 0.0
        %644 = vmatpush.msra.mxu0 0.0
        %645 = vmatpush.msra.mxu0 0.0
        %646 = vmatpush.msra.mxu0 0.0
        %647 = vmatpush.msra.mxu0 0.0
        %648 = vmatpush.msra.mxu0 0.0
        %649 = vmatpush.msra.mxu0 0.0
        %650 = vmatpush.msra.mxu0 0.0
        %651 = vmatpush.msra.mxu0 0.0
        %652 = vmatpush.msra.mxu0 0.0
        %653 = vmatpush.msra.mxu0 0.0
        %654 = vmatpush.msra.mxu0 0.0
        %655 = vmatpush.msra.mxu0 %v311
        %656 = vmatpush.msra.mxu0 %v307
        %657 = vmatpush.msra.mxu0 %v303
        %658 = vmatpush.msra.mxu0 %v299
        %659 = vmatmul.f32.gmra.mxu0 %v641
        %v660 = vpop.f32.mrf.mxu0
        %v661 = vadd.f32 0.0, %v660
        %662 = vdwg.mxu0
        %663 = vmatpush.msra.mxu0 0.0
        %664 = vmatpush.msra.mxu0 0.0
        %665 = vmatpush.msra.mxu0 0.0
        %666 = vmatpush.msra.mxu0 0.0
        %667 = vmatpush.msra.mxu0 0.0
        %668 = vmatpush.msra.mxu0 0.0
        %669 = vmatpush.msra.mxu0 0.0
        %670 = vmatpush.msra.mxu0 0.0
        %671 = vmatpush.msra.mxu0 0.0
        %672 = vmatpush.msra.mxu0 0.0
        %673 = vmatpush.msra.mxu0 0.0
        %674 = vmatpush.msra.mxu0 0.0
        %675 = vmatpush.msra.mxu0 %v312
        %676 = vmatpush.msra.mxu0 %v308
        %677 = vmatpush.msra.mxu0 %v304
        %678 = vmatpush.msra.mxu0 %v300
        %679 = vmatmul.f32.gmra.mxu0 %v641
        %v680 = vpop.f32.mrf.mxu0
        %v681 = vadd.f32 0.0, %v680
        %682 = vdwg.mxu0
        %683 = vmatpush.msra.mxu0 0.0
        %684 = vmatpush.msra.mxu0 0.0
        %685 = vmatpush.msra.mxu0 0.0
        %686 = vmatpush.msra.mxu0 0.0
        %687 = vmatpush.msra.mxu0 0.0
        %688 = vmatpush.msra.mxu0 0.0
        %689 = vmatpush.msra.mxu0 0.0
        %690 = vmatpush.msra.mxu0 0.0
        %691 = vmatpush.msra.mxu0 0.0
        %692 = vmatpush.msra.mxu0 0.0
        %693 = vmatpush.msra.mxu0 0.0
        %694 = vmatpush.msra.mxu0 0.0
        %695 = vmatpush.msra.mxu0 %v313
        %696 = vmatpush.msra.mxu0 %v309
        %697 = vmatpush.msra.mxu0 %v305
        %698 = vmatpush.msra.mxu0 %v301
        %699 = vmatmul.f32.gmra.mxu0 %v641
        %v700 = vpop.f32.mrf.mxu0
        %v701 = vadd.f32 0.0, %v700
        %702 = vdwg.mxu0
        %703 = vmatpush.msra.mxu0 0.0
        %704 = vmatpush.msra.mxu0 0.0
        %705 = vmatpush.msra.mxu0 0.0
        %706 = vmatpush.msra.mxu0 0.0
        %707 = vmatpush.msra.mxu0 0.0
        %708 = vmatpush.msra.mxu0 0.0
        %709 = vmatpush.msra.mxu0 0.0
        %710 = vmatpush.msra.mxu0 0.0
        %711 = vmatpush.msra.mxu0 0.0
        %712 = vmatpush.msra.mxu0 0.0
        %713 = vmatpush.msra.mxu0 0.0
        %714 = vmatpush.msra.mxu0 0.0
        %715 = vmatpush.msra.mxu0 %v314
        %716 = vmatpush.msra.mxu0 %v310
        %717 = vmatpush.msra.mxu0 %v306
        %718 = vmatpush.msra.mxu0 %v302
        %719 = vmatmul.f32.gmra.mxu0 %v641
        %v720 = vpop.f32.mrf.mxu0
        %v721 = vadd.f32 0.0, %v720
        %722 = vdwg.mxu0
        %v723 = vadd.f32 %v636, %v661
        %v724 = vadd.f32 %v637, %v681
        %v725 = vadd.f32 %v638, %v701
        %v726 = vadd.f32 %v639, %v721
        %v727 = vxor.u32 %v723, 2147483648
        %v728 = vxor.u32 %v724, 2147483648
        %v729 = vxor.u32 %v725, 2147483648
        %v730 = vmul.f32 %v727, 1.442695
        %v731 = vpow.pop %v730
        %v732 = vmul.f32 %v728, 1.442695
        %v733 = vpow.pop %v732
        %v734 = vmul.f32 %v729, 1.442695
        %v735 = vpow.pop %v734
        %v736 = vadd.f32 %v731, 1.0
        %v737 = vadd.f32 %v733, 1.0
        %v738 = vadd.f32 %v735, 1.0
        %v739 = vrcp.pop %v736
        %v740 = vmul.f32 %v736, %v739
        %v741 = vsub.f32 1.0, %v740
        %v742 = vmul.f32 %v739, %v741
        %v743 = vadd.f32 %v739, %v742
        %vm744 = vweird.f32 %v736
        %vm745 = vweird.f32 %v739
        %vm746 = vmor %vm744, %vm745
        %v747 = vsel %vm746, %v739, %v743
        %v748 = vand.u32 2147483647, %v736
        %vm749 = vcmp.eq.f32.partialorder %v748, 8.507059e+37
        %v750 = vand.u32 %v736, 2147483648
        %v751 = vor.u32 1.1754944e-38, %v750
        %v752 = vsel %vm749, %v751, %v747
        %v753 = vmul.f32 1.0, %v752
        %v754 = vrcp.pop %v737
        %v755 = vmul.f32 %v737, %v754
        %v756 = vsub.f32 1.0, %v755
        %v757 = vmul.f32 %v754, %v756
        %v758 = vadd.f32 %v754, %v757
        %vm759 = vweird.f32 %v737
        %vm760 = vweird.f32 %v754
        %vm761 = vmor %vm759, %vm760
        %v762 = vsel %vm761, %v754, %v758
        %v763 = vand.u32 2147483647, %v737
        %vm764 = vcmp.eq.f32.partialorder %v763, 8.507059e+37
        %v765 = vand.u32 %v737, 2147483648
        %v766 = vor.u32 1.1754944e-38, %v765
        %v767 = vsel %vm764, %v766, %v762
        %v768 = vmul.f32 1.0, %v767
        %v769 = vrcp.pop %v738
        %v770 = vmul.f32 %v738, %v769
        %v771 = vsub.f32 1.0, %v770
        %v772 = vmul.f32 %v769, %v771
        %v773 = vadd.f32 %v769, %v772
        %vm774 = vweird.f32 %v738
        %vm775 = vweird.f32 %v769
        %vm776 = vmor %vm774, %vm775
        %v777 = vsel %vm776, %v769, %v773
        %v778 = vand.u32 2147483647, %v738
        %vm779 = vcmp.eq.f32.partialorder %v778, 8.507059e+37
        %v780 = vand.u32 %v738, 2147483648
        %v781 = vor.u32 1.1754944e-38, %v780
        %v782 = vsel %vm779, %v781, %v777
        %v783 = vmul.f32 1.0, %v782
        %v784 = vtanh.pop %v726
        %v785 = vmul.f32 %v768, %v625
        %v786 = vmul.f32 %v753, %v784
        %v787 = vadd.f32 %v785, %v786
        %v788 = vtanh.pop %v787
        %v789 = vmul.f32 %v783, %v788
        %790 = vset.pattern.permute.xlu0 3
        %791 = vperm.xlu0 %790, %v267
        %v792 = vpop.permute.xlu0 %791
        %v794 = vmul.f32 %v792, %v274
        %v795 = vmul.f32 %v792, %v275
        %v796 = vmul.f32 %v792, %v276
        %v797 = vmul.f32 %v792, %v277
        %v798 = vadd.f32 %v794, %v287
        %v799 = vadd.f32 %v795, %v288
        %v800 = vadd.f32 %v796, %v289
        %v801 = vadd.f32 %v797, %v290
        %v803 = vsel %vm315, %v789, 0
        %805 = vmatpush.msra.mxu0 0.0
        %806 = vmatpush.msra.mxu0 0.0
        %807 = vmatpush.msra.mxu0 0.0
        %808 = vmatpush.msra.mxu0 0.0
        %809 = vmatpush.msra.mxu0 0.0
        %810 = vmatpush.msra.mxu0 0.0
        %811 = vmatpush.msra.mxu0 0.0
        %812 = vmatpush.msra.mxu0 0.0
        %813 = vmatpush.msra.mxu0 0.0
        %814 = vmatpush.msra.mxu0 0.0
        %815 = vmatpush.msra.mxu0 0.0
        %816 = vmatpush.msra.mxu0 0.0
        %817 = vmatpush.msra.mxu0 %v311
        %818 = vmatpush.msra.mxu0 %v307
        %819 = vmatpush.msra.mxu0 %v303
        %820 = vmatpush.msra.mxu0 %v299
        %821 = vmatmul.f32.gmra.mxu0 %v803
        %v822 = vpop.f32.mrf.mxu0
        %v823 = vadd.f32 0.0, %v822
        %824 = vdwg.mxu0
        %825 = vmatpush.msra.mxu0 0.0
        %826 = vmatpush.msra.mxu0 0.0
        %827 = vmatpush.msra.mxu0 0.0
        %828 = vmatpush.msra.mxu0 0.0
        %829 = vmatpush.msra.mxu0 0.0
        %830 = vmatpush.msra.mxu0 0.0
        %831 = vmatpush.msra.mxu0 0.0
        %832 = vmatpush.msra.mxu0 0.0
        %833 = vmatpush.msra.mxu0 0.0
        %834 = vmatpush.msra.mxu0 0.0
        %835 = vmatpush.msra.mxu0 0.0
        %836 = vmatpush.msra.mxu0 0.0
        %837 = vmatpush.msra.mxu0 %v312
        %838 = vmatpush.msra.mxu0 %v308
        %839 = vmatpush.msra.mxu0 %v304
        %840 = vmatpush.msra.mxu0 %v300
        %841 = vmatmul.f32.gmra.mxu0 %v803
        %v842 = vpop.f32.mrf.mxu0
        %v843 = vadd.f32 0.0, %v842
        %844 = vdwg.mxu0
        %845 = vmatpush.msra.mxu0 0.0
        %846 = vmatpush.msra.mxu0 0.0
        %847 = vmatpush.msra.mxu0 0.0
        %848 = vmatpush.msra.mxu0 0.0
        %849 = vmatpush.msra.mxu0 0.0
        %850 = vmatpush.msra.mxu0 0.0
        %851 = vmatpush.msra.mxu0 0.0
        %852 = vmatpush.msra.mxu0 0.0
        %853 = vmatpush.msra.mxu0 0.0
        %854 = vmatpush.msra.mxu0 0.0
        %855 = vmatpush.msra.mxu0 0.0
        %856 = vmatpush.msra.mxu0 0.0
        %857 = vmatpush.msra.mxu0 %v313
        %858 = vmatpush.msra.mxu0 %v309
        %859 = vmatpush.msra.mxu0 %v305
        %860 = vmatpush.msra.mxu0 %v301
        %861 = vmatmul.f32.gmra.mxu0 %v803
        %v862 = vpop.f32.mrf.mxu0
        %v863 = vadd.f32 0.0, %v862
        %864 = vdwg.mxu0
        %865 = vmatpush.msra.mxu0 0.0
        %866 = vmatpush.msra.mxu0 0.0
        %867 = vmatpush.msra.mxu0 0.0
        %868 = vmatpush.msra.mxu0 0.0
        %869 = vmatpush.msra.mxu0 0.0
        %870 = vmatpush.msra.mxu0 0.0
        %871 = vmatpush.msra.mxu0 0.0
        %872 = vmatpush.msra.mxu0 0.0
        %873 = vmatpush.msra.mxu0 0.0
        %874 = vmatpush.msra.mxu0 0.0
        %875 = vmatpush.msra.mxu0 0.0
        %876 = vmatpush.msra.mxu0 0.0
        %877 = vmatpush.msra.mxu0 %v314
        %878 = vmatpush.msra.mxu0 %v310
        %879 = vmatpush.msra.mxu0 %v306
        %880 = vmatpush.msra.mxu0 %v302
        %881 = vmatmul.f32.gmra.mxu0 %v803
        %v882 = vpop.f32.mrf.mxu0
        %v883 = vadd.f32 0.0, %v882
        %884 = vdwg.mxu0
        %v885 = vadd.f32 %v798, %v823
        %v886 = vadd.f32 %v799, %v843
        %v887 = vadd.f32 %v800, %v863
        %v888 = vadd.f32 %v801, %v883
        %v889 = vxor.u32 %v885, 2147483648
        %v890 = vxor.u32 %v886, 2147483648
        %v891 = vxor.u32 %v887, 2147483648
        %v892 = vmul.f32 %v889, 1.442695
        %v893 = vpow.pop %v892
        %v894 = vmul.f32 %v890, 1.442695
        %v895 = vpow.pop %v894
        %v896 = vmul.f32 %v891, 1.442695
        %v897 = vpow.pop %v896
        %v898 = vadd.f32 %v893, 1.0
        %v899 = vadd.f32 %v895, 1.0
        %v900 = vadd.f32 %v897, 1.0
        %v901 = vrcp.pop %v898
        %v902 = vmul.f32 %v898, %v901
        %v903 = vsub.f32 1.0, %v902
        %v904 = vmul.f32 %v901, %v903
        %v905 = vadd.f32 %v901, %v904
        %vm906 = vweird.f32 %v898
        %vm907 = vweird.f32 %v901
        %vm908 = vmor %vm906, %vm907
        %v909 = vsel %vm908, %v901, %v905
        %v910 = vand.u32 2147483647, %v898
        %vm911 = vcmp.eq.f32.partialorder %v910, 8.507059e+37
        %v912 = vand.u32 %v898, 2147483648
        %v913 = vor.u32 1.1754944e-38, %v912
        %v914 = vsel %vm911, %v913, %v909
        %v915 = vmul.f32 1.0, %v914
        %v916 = vrcp.pop %v899
        %v917 = vmul.f32 %v899, %v916
        %v918 = vsub.f32 1.0, %v917
        %v919 = vmul.f32 %v916, %v918
        %v920 = vadd.f32 %v916, %v919
        %vm921 = vweird.f32 %v899
        %vm922 = vweird.f32 %v916
        %vm923 = vmor %vm921, %vm922
        %v924 = vsel %vm923, %v916, %v920
        %v925 = vand.u32 2147483647, %v899
        %vm926 = vcmp.eq.f32.partialorder %v925, 8.507059e+37
        %v927 = vand.u32 %v899, 2147483648
        %v928 = vor.u32 1.1754944e-38, %v927
        %v929 = vsel %vm926, %v928, %v924
        %v930 = vmul.f32 1.0, %v929
        %v931 = vrcp.pop %v900
        %v932 = vmul.f32 %v900, %v931
        %v933 = vsub.f32 1.0, %v932
        %v934 = vmul.f32 %v931, %v933
        %v935 = vadd.f32 %v931, %v934
        %vm936 = vweird.f32 %v900
        %vm937 = vweird.f32 %v931
        %vm938 = vmor %vm936, %vm937
        %v939 = vsel %vm938, %v931, %v935
        %v940 = vand.u32 2147483647, %v900
        %vm941 = vcmp.eq.f32.partialorder %v940, 8.507059e+37
        %v942 = vand.u32 %v900, 2147483648
        %v943 = vor.u32 1.1754944e-38, %v942
        %v944 = vsel %vm941, %v943, %v939
        %v945 = vmul.f32 1.0, %v944
        %v946 = vtanh.pop %v888
        %v947 = vmul.f32 %v930, %v787
        %v948 = vmul.f32 %v915, %v946
        %v949 = vadd.f32 %v947, %v948
        %v950 = vtanh.pop %v949
        %v951 = vmul.f32 %v945, %v950
        %952 = vset.pattern.permute.xlu0 4
        %953 = vperm.xlu0 %952, %v267
        %v954 = vpop.permute.xlu0 %953
        %v956 = vmul.f32 %v954, %v274
        %v957 = vmul.f32 %v954, %v275
        %v958 = vmul.f32 %v954, %v276
        %v959 = vmul.f32 %v954, %v277
        %v960 = vadd.f32 %v956, %v287
        %v961 = vadd.f32 %v957, %v288
        %v962 = vadd.f32 %v958, %v289
        %v963 = vadd.f32 %v959, %v290
        %v965 = vsel %vm315, %v951, 0
        %967 = vmatpush.msra.mxu0 0.0
        %968 = vmatpush.msra.mxu0 0.0
        %969 = vmatpush.msra.mxu0 0.0
        %970 = vmatpush.msra.mxu0 0.0
        %971 = vmatpush.msra.mxu0 0.0
        %972 = vmatpush.msra.mxu0 0.0
        %973 = vmatpush.msra.mxu0 0.0
        %974 = vmatpush.msra.mxu0 0.0
        %975 = vmatpush.msra.mxu0 0.0
        %976 = vmatpush.msra.mxu0 0.0
        %977 = vmatpush.msra.mxu0 0.0
        %978 = vmatpush.msra.mxu0 0.0
        %979 = vmatpush.msra.mxu0 %v311
        %980 = vmatpush.msra.mxu0 %v307
        %981 = vmatpush.msra.mxu0 %v303
        %982 = vmatpush.msra.mxu0 %v299
        %983 = vmatmul.f32.gmra.mxu0 %v965
        %v984 = vpop.f32.mrf.mxu0
        %v985 = vadd.f32 0.0, %v984
        %986 = vdwg.mxu0
        %987 = vmatpush.msra.mxu0 0.0
        %988 = vmatpush.msra.mxu0 0.0
        %989 = vmatpush.msra.mxu0 0.0
        %990 = vmatpush.msra.mxu0 0.0
        %991 = vmatpush.msra.mxu0 0.0
        %992 = vmatpush.msra.mxu0 0.0
        %993 = vmatpush.msra.mxu0 0.0
        %994 = vmatpush.msra.mxu0 0.0
        %995 = vmatpush.msra.mxu0 0.0
        %996 = vmatpush.msra.mxu0 0.0
        %997 = vmatpush.msra.mxu0 0.0
        %998 = vmatpush.msra.mxu0 0.0
        %999 = vmatpush.msra.mxu0 %v312
        %1000 = vmatpush.msra.mxu0 %v308
        %1001 = vmatpush.msra.mxu0 %v304
        %1002 = vmatpush.msra.mxu0 %v300
        %1003 = vmatmul.f32.gmra.mxu0 %v965
        %v1004 = vpop.f32.mrf.mxu0
        %v1005 = vadd.f32 0.0, %v1004
        %1006 = vdwg.mxu0
        %1007 = vmatpush.msra.mxu0 0.0
        %1008 = vmatpush.msra.mxu0 0.0
        %1009 = vmatpush.msra.mxu0 0.0
        %1010 = vmatpush.msra.mxu0 0.0
        %1011 = vmatpush.msra.mxu0 0.0
        %1012 = vmatpush.msra.mxu0 0.0
        %1013 = vmatpush.msra.mxu0 0.0
        %1014 = vmatpush.msra.mxu0 0.0
        %1015 = vmatpush.msra.mxu0 0.0
        %1016 = vmatpush.msra.mxu0 0.0
        %1017 = vmatpush.msra.mxu0 0.0
        %1018 = vmatpush.msra.mxu0 0.0
        %1019 = vmatpush.msra.mxu0 %v313
        %1020 = vmatpush.msra.mxu0 %v309
        %1021 = vmatpush.msra.mxu0 %v305
        %1022 = vmatpush.msra.mxu0 %v301
        %1023 = vmatmul.f32.gmra.mxu0 %v965
        %v1024 = vpop.f32.mrf.mxu0
        %v1025 = vadd.f32 0.0, %v1024
        %1026 = vdwg.mxu0
        %1027 = vmatpush.msra.mxu0 0.0
        %1028 = vmatpush.msra.mxu0 0.0
        %1029 = vmatpush.msra.mxu0 0.0
        %1030 = vmatpush.msra.mxu0 0.0
        %1031 = vmatpush.msra.mxu0 0.0
        %1032 = vmatpush.msra.mxu0 0.0
        %1033 = vmatpush.msra.mxu0 0.0
        %1034 = vmatpush.msra.mxu0 0.0
        %1035 = vmatpush.msra.mxu0 0.0
        %1036 = vmatpush.msra.mxu0 0.0
        %1037 = vmatpush.msra.mxu0 0.0
        %1038 = vmatpush.msra.mxu0 0.0
        %1039 = vmatpush.msra.mxu0 %v314
        %1040 = vmatpush.msra.mxu0 %v310
        %1041 = vmatpush.msra.mxu0 %v306
        %1042 = vmatpush.msra.mxu0 %v302
        %1043 = vmatmul.f32.gmra.mxu0 %v965
        %v1044 = vpop.f32.mrf.mxu0
        %v1045 = vadd.f32 0.0, %v1044
        %1046 = vdwg.mxu0
        %v1047 = vadd.f32 %v960, %v985
        %v1048 = vadd.f32 %v961, %v1005
        %v1049 = vadd.f32 %v962, %v1025
        %v1050 = vadd.f32 %v963, %v1045
        %v1051 = vxor.u32 %v1047, 2147483648
        %v1052 = vxor.u32 %v1048, 2147483648
        %v1053 = vxor.u32 %v1049, 2147483648
        %v1054 = vmul.f32 %v1051, 1.442695
        %v1055 = vpow.pop %v1054
        %v1056 = vmul.f32 %v1052, 1.442695
        %v1057 = vpow.pop %v1056
        %v1058 = vmul.f32 %v1053, 1.442695
        %v1059 = vpow.pop %v1058
        %v1060 = vadd.f32 %v1055, 1.0
        %v1061 = vadd.f32 %v1057, 1.0
        %v1062 = vadd.f32 %v1059, 1.0
        %v1063 = vrcp.pop %v1060
        %v1064 = vmul.f32 %v1060, %v1063
        %v1065 = vsub.f32 1.0, %v1064
        %v1066 = vmul.f32 %v1063, %v1065
        %v1067 = vadd.f32 %v1063, %v1066
        %vm1068 = vweird.f32 %v1060
        %vm1069 = vweird.f32 %v1063
        %vm1070 = vmor %vm1068, %vm1069
        %v1071 = vsel %vm1070, %v1063, %v1067
        %v1072 = vand.u32 2147483647, %v1060
        %vm1073 = vcmp.eq.f32.partialorder %v1072, 8.507059e+37
        %v1074 = vand.u32 %v1060, 2147483648
        %v1075 = vor.u32 1.1754944e-38, %v1074
        %v1076 = vsel %vm1073, %v1075, %v1071
        %v1077 = vmul.f32 1.0, %v1076
        %v1078 = vrcp.pop %v1061
        %v1079 = vmul.f32 %v1061, %v1078
        %v1080 = vsub.f32 1.0, %v1079
        %v1081 = vmul.f32 %v1078, %v1080
        %v1082 = vadd.f32 %v1078, %v1081
        %vm1083 = vweird.f32 %v1061
        %vm1084 = vweird.f32 %v1078
        %vm1085 = vmor %vm1083, %vm1084
        %v1086 = vsel %vm1085, %v1078, %v1082
        %v1087 = vand.u32 2147483647, %v1061
        %vm1088 = vcmp.eq.f32.partialorder %v1087, 8.507059e+37
        %v1089 = vand.u32 %v1061, 2147483648
        %v1090 = vor.u32 1.1754944e-38, %v1089
        %v1091 = vsel %vm1088, %v1090, %v1086
        %v1092 = vmul.f32 1.0, %v1091
        %v1093 = vrcp.pop %v1062
        %v1094 = vmul.f32 %v1062, %v1093
        %v1095 = vsub.f32 1.0, %v1094
        %v1096 = vmul.f32 %v1093, %v1095
        %v1097 = vadd.f32 %v1093, %v1096
        %vm1098 = vweird.f32 %v1062
        %vm1099 = vweird.f32 %v1093
        %vm1100 = vmor %vm1098, %vm1099
        %v1101 = vsel %vm1100, %v1093, %v1097
        %v1102 = vand.u32 2147483647, %v1062
        %vm1103 = vcmp.eq.f32.partialorder %v1102, 8.507059e+37
        %v1104 = vand.u32 %v1062, 2147483648
        %v1105 = vor.u32 1.1754944e-38, %v1104
        %v1106 = vsel %vm1103, %v1105, %v1101
        %v1107 = vmul.f32 1.0, %v1106
        %v1108 = vtanh.pop %v1050
        %v1109 = vmul.f32 %v1092, %v949
        %v1110 = vmul.f32 %v1077, %v1108
        %v1111 = vadd.f32 %v1109, %v1110
        %v1112 = vtanh.pop %v1111
        %v1113 = vmul.f32 %v1107, %v1112
        %1114 = vset.pattern.permute.xlu0 5
        %1115 = vperm.xlu0 %1114, %v267
        %v1116 = vpop.permute.xlu0 %1115
        %v1118 = vmul.f32 %v1116, %v274
        %v1119 = vmul.f32 %v1116, %v275
        %v1120 = vmul.f32 %v1116, %v276
        %v1121 = vmul.f32 %v1116, %v277
        %v1122 = vadd.f32 %v1118, %v287
        %v1123 = vadd.f32 %v1119, %v288
        %v1124 = vadd.f32 %v1120, %v289
        %v1125 = vadd.f32 %v1121, %v290
        %v1127 = vsel %vm315, %v1113, 0
        %1129 = vmatpush.msra.mxu0 0.0
        %1130 = vmatpush.msra.mxu0 0.0
        %1131 = vmatpush.msra.mxu0 0.0
        %1132 = vmatpush.msra.mxu0 0.0
        %1133 = vmatpush.msra.mxu0 0.0
        %1134 = vmatpush.msra.mxu0 0.0
        %1135 = vmatpush.msra.mxu0 0.0
        %1136 = vmatpush.msra.mxu0 0.0
        %1137 = vmatpush.msra.mxu0 0.0
        %1138 = vmatpush.msra.mxu0 0.0
        %1139 = vmatpush.msra.mxu0 0.0
        %1140 = vmatpush.msra.mxu0 0.0
        %1141 = vmatpush.msra.mxu0 %v311
        %1142 = vmatpush.msra.mxu0 %v307
        %1143 = vmatpush.msra.mxu0 %v303
        %1144 = vmatpush.msra.mxu0 %v299
        %1145 = vmatmul.f32.gmra.mxu0 %v1127
        %v1146 = vpop.f32.mrf.mxu0
        %v1147 = vadd.f32 0.0, %v1146
        %1148 = vdwg.mxu0
        %1149 = vmatpush.msra.mxu0 0.0
        %1150 = vmatpush.msra.mxu0 0.0
        %1151 = vmatpush.msra.mxu0 0.0
        %1152 = vmatpush.msra.mxu0 0.0
        %1153 = vmatpush.msra.mxu0 0.0
        %1154 = vmatpush.msra.mxu0 0.0
        %1155 = vmatpush.msra.mxu0 0.0
        %1156 = vmatpush.msra.mxu0 0.0
        %1157 = vmatpush.msra.mxu0 0.0
        %1158 = vmatpush.msra.mxu0 0.0
        %1159 = vmatpush.msra.mxu0 0.0
        %1160 = vmatpush.msra.mxu0 0.0
        %1161 = vmatpush.msra.mxu0 %v312
        %1162 = vmatpush.msra.mxu0 %v308
        %1163 = vmatpush.msra.mxu0 %v304
        %1164 = vmatpush.msra.mxu0 %v300
        %1165 = vmatmul.f32.gmra.mxu0 %v1127
        %v1166 = vpop.f32.mrf.mxu0
        %v1167 = vadd.f32 0.0, %v1166
        %1168 = vdwg.mxu0
        %1169 = vmatpush.msra.mxu0 0.0
        %1170 = vmatpush.msra.mxu0 0.0
        %1171 = vmatpush.msra.mxu0 0.0
        %1172 = vmatpush.msra.mxu0 0.0
        %1173 = vmatpush.msra.mxu0 0.0
        %1174 = vmatpush.msra.mxu0 0.0
        %1175 = vmatpush.msra.mxu0 0.0
        %1176 = vmatpush.msra.mxu0 0.0
        %1177 = vmatpush.msra.mxu0 0.0
        %1178 = vmatpush.msra.mxu0 0.0
        %1179 = vmatpush.msra.mxu0 0.0
        %1180 = vmatpush.msra.mxu0 0.0
        %1181 = vmatpush.msra.mxu0 %v313
        %1182 = vmatpush.msra.mxu0 %v309
        %1183 = vmatpush.msra.mxu0 %v305
        %1184 = vmatpush.msra.mxu0 %v301
        %1185 = vmatmul.f32.gmra.mxu0 %v1127
        %v1186 = vpop.f32.mrf.mxu0
        %v1187 = vadd.f32 0.0, %v1186
        %1188 = vdwg.mxu0
        %1189 = vmatpush.msra.mxu0 0.0
        %1190 = vmatpush.msra.mxu0 0.0
        %1191 = vmatpush.msra.mxu0 0.0
        %1192 = vmatpush.msra.mxu0 0.0
        %1193 = vmatpush.msra.mxu0 0.0
        %1194 = vmatpush.msra.mxu0 0.0
        %1195 = vmatpush.msra.mxu0 0.0
        %1196 = vmatpush.msra.mxu0 0.0
        %1197 = vmatpush.msra.mxu0 0.0
        %1198 = vmatpush.msra.mxu0 0.0
        %1199 = vmatpush.msra.mxu0 0.0
        %1200 = vmatpush.msra.mxu0 0.0
        %1201 = vmatpush.msra.mxu0 %v314
        %1202 = vmatpush.msra.mxu0 %v310
        %1203 = vmatpush.msra.mxu0 %v306
        %1204 = vmatpush.msra.mxu0 %v302
        %1205 = vmatmul.f32.gmra.mxu0 %v1127
        %v1206 = vpop.f32.mrf.mxu0
        %v1207 = vadd.f32 0.0, %v1206
        %1208 = vdwg.mxu0
        %v1209 = vadd.f32 %v1122, %v1147
        %v1210 = vadd.f32 %v1123, %v1167
        %v1211 = vadd.f32 %v1124, %v1187
        %v1212 = vadd.f32 %v1125, %v1207
        %v1213 = vxor.u32 %v1209, 2147483648
        %v1214 = vxor.u32 %v1210, 2147483648
        %v1215 = vxor.u32 %v1211, 2147483648
        %v1216 = vmul.f32 %v1213, 1.442695
        %v1217 = vpow.pop %v1216
        %v1218 = vmul.f32 %v1214, 1.442695
        %v1219 = vpow.pop %v1218
        %v1220 = vmul.f32 %v1215, 1.442695
        %v1221 = vpow.pop %v1220
        %v1222 = vadd.f32 %v1217, 1.0
        %v1223 = vadd.f32 %v1219, 1.0
        %v1224 = vadd.f32 %v1221, 1.0
        %v1225 = vrcp.pop %v1222
        %v1226 = vmul.f32 %v1222, %v1225
        %v1227 = vsub.f32 1.0, %v1226
        %v1228 = vmul.f32 %v1225, %v1227
        %v1229 = vadd.f32 %v1225, %v1228
        %vm1230 = vweird.f32 %v1222
        %vm1231 = vweird.f32 %v1225
        %vm1232 = vmor %vm1230, %vm1231
        %v1233 = vsel %vm1232, %v1225, %v1229
        %v1234 = vand.u32 2147483647, %v1222
        %vm1235 = vcmp.eq.f32.partialorder %v1234, 8.507059e+37
        %v1236 = vand.u32 %v1222, 2147483648
        %v1237 = vor.u32 1.1754944e-38, %v1236
        %v1238 = vsel %vm1235, %v1237, %v1233
        %v1239 = vmul.f32 1.0, %v1238
        %v1240 = vrcp.pop %v1223
        %v1241 = vmul.f32 %v1223, %v1240
        %v1242 = vsub.f32 1.0, %v1241
        %v1243 = vmul.f32 %v1240, %v1242
        %v1244 = vadd.f32 %v1240, %v1243
        %vm1245 = vweird.f32 %v1223
        %vm1246 = vweird.f32 %v1240
        %vm1247 = vmor %vm1245, %vm1246
        %v1248 = vsel %vm1247, %v1240, %v1244
        %v1249 = vand.u32 2147483647, %v1223
        %vm1250 = vcmp.eq.f32.partialorder %v1249, 8.507059e+37
        %v1251 = vand.u32 %v1223, 2147483648
        %v1252 = vor.u32 1.1754944e-38, %v1251
        %v1253 = vsel %vm1250, %v1252, %v1248
        %v1254 = vmul.f32 1.0, %v1253
        %v1255 = vrcp.pop %v1224
        %v1256 = vmul.f32 %v1224, %v1255
        %v1257 = vsub.f32 1.0, %v1256
        %v1258 = vmul.f32 %v1255, %v1257
        %v1259 = vadd.f32 %v1255, %v1258
        %vm1260 = vweird.f32 %v1224
        %vm1261 = vweird.f32 %v1255
        %vm1262 = vmor %vm1260, %vm1261
        %v1263 = vsel %vm1262, %v1255, %v1259
        %v1264 = vand.u32 2147483647, %v1224
        %vm1265 = vcmp.eq.f32.partialorder %v1264, 8.507059e+37
        %v1266 = vand.u32 %v1224, 2147483648
        %v1267 = vor.u32 1.1754944e-38, %v1266
        %v1268 = vsel %vm1265, %v1267, %v1263
        %v1269 = vmul.f32 1.0, %v1268
        %v1270 = vtanh.pop %v1212
        %v1271 = vmul.f32 %v1254, %v1111
        %v1272 = vmul.f32 %v1239, %v1270
        %v1273 = vadd.f32 %v1271, %v1272
        %v1274 = vtanh.pop %v1273
        %v1275 = vmul.f32 %v1269, %v1274
        %1276 = vset.pattern.permute.xlu0 6
        %1277 = vperm.xlu0 %1276, %v267
        %v1278 = vpop.permute.xlu0 %1277
        %v1280 = vmul.f32 %v1278, %v274
        %v1281 = vmul.f32 %v1278, %v275
        %v1282 = vmul.f32 %v1278, %v276
        %v1283 = vmul.f32 %v1278, %v277
        %v1284 = vadd.f32 %v1280, %v287
        %v1285 = vadd.f32 %v1281, %v288
        %v1286 = vadd.f32 %v1282, %v289
        %v1287 = vadd.f32 %v1283, %v290
        %v1289 = vsel %vm315, %v1275, 0
        %1291 = vmatpush.msra.mxu0 0.0
        %1292 = vmatpush.msra.mxu0 0.0
        %1293 = vmatpush.msra.mxu0 0.0
        %1294 = vmatpush.msra.mxu0 0.0
        %1295 = vmatpush.msra.mxu0 0.0
        %1296 = vmatpush.msra.mxu0 0.0
        %1297 = vmatpush.msra.mxu0 0.0
        %1298 = vmatpush.msra.mxu0 0.0
        %1299 = vmatpush.msra.mxu0 0.0
        %1300 = vmatpush.msra.mxu0 0.0
        %1301 = vmatpush.msra.mxu0 0.0
        %1302 = vmatpush.msra.mxu0 0.0
        %1303 = vmatpush.msra.mxu0 %v311
        %1304 = vmatpush.msra.mxu0 %v307
        %1305 = vmatpush.msra.mxu0 %v303
        %1306 = vmatpush.msra.mxu0 %v299
        %1307 = vmatmul.f32.gmra.mxu0 %v1289
        %v1308 = vpop.f32.mrf.mxu0
        %v1309 = vadd.f32 0.0, %v1308
        %1310 = vdwg.mxu0
        %1311 = vmatpush.msra.mxu0 0.0
        %1312 = vmatpush.msra.mxu0 0.0
        %1313 = vmatpush.msra.mxu0 0.0
        %1314 = vmatpush.msra.mxu0 0.0
        %1315 = vmatpush.msra.mxu0 0.0
        %1316 = vmatpush.msra.mxu0 0.0
        %1317 = vmatpush.msra.mxu0 0.0
        %1318 = vmatpush.msra.mxu0 0.0
        %1319 = vmatpush.msra.mxu0 0.0
        %1320 = vmatpush.msra.mxu0 0.0
        %1321 = vmatpush.msra.mxu0 0.0
        %1322 = vmatpush.msra.mxu0 0.0
        %1323 = vmatpush.msra.mxu0 %v312
        %1324 = vmatpush.msra.mxu0 %v308
        %1325 = vmatpush.msra.mxu0 %v304
        %1326 = vmatpush.msra.mxu0 %v300
        %1327 = vmatmul.f32.gmra.mxu0 %v1289
        %v1328 = vpop.f32.mrf.mxu0
        %v1329 = vadd.f32 0.0, %v1328
        %1330 = vdwg.mxu0
        %1331 = vmatpush.msra.mxu0 0.0
        %1332 = vmatpush.msra.mxu0 0.0
        %1333 = vmatpush.msra.mxu0 0.0
        %1334 = vmatpush.msra.mxu0 0.0
        %1335 = vmatpush.msra.mxu0 0.0
        %1336 = vmatpush.msra.mxu0 0.0
        %1337 = vmatpush.msra.mxu0 0.0
        %1338 = vmatpush.msra.mxu0 0.0
        %1339 = vmatpush.msra.mxu0 0.0
        %1340 = vmatpush.msra.mxu0 0.0
        %1341 = vmatpush.msra.mxu0 0.0
        %1342 = vmatpush.msra.mxu0 0.0
        %1343 = vmatpush.msra.mxu0 %v313
        %1344 = vmatpush.msra.mxu0 %v309
        %1345 = vmatpush.msra.mxu0 %v305
        %1346 = vmatpush.msra.mxu0 %v301
        %1347 = vmatmul.f32.gmra.mxu0 %v1289
        %v1348 = vpop.f32.mrf.mxu0
        %v1349 = vadd.f32 0.0, %v1348
        %1350 = vdwg.mxu0
        %1351 = vmatpush.msra.mxu0 0.0
        %1352 = vmatpush.msra.mxu0 0.0
        %1353 = vmatpush.msra.mxu0 0.0
        %1354 = vmatpush.msra.mxu0 0.0
        %1355 = vmatpush.msra.mxu0 0.0
        %1356 = vmatpush.msra.mxu0 0.0
        %1357 = vmatpush.msra.mxu0 0.0
        %1358 = vmatpush.msra.mxu0 0.0
        %1359 = vmatpush.msra.mxu0 0.0
        %1360 = vmatpush.msra.mxu0 0.0
        %1361 = vmatpush.msra.mxu0 0.0
        %1362 = vmatpush.msra.mxu0 0.0
        %1363 = vmatpush.msra.mxu0 %v314
        %1364 = vmatpush.msra.mxu0 %v310
        %1365 = vmatpush.msra.mxu0 %v306
        %1366 = vmatpush.msra.mxu0 %v302
        %1367 = vmatmul.f32.gmra.mxu0 %v1289
        %v1368 = vpop.f32.mrf.mxu0
        %v1369 = vadd.f32 0.0, %v1368
        %1370 = vdwg.mxu0
        %v1371 = vadd.f32 %v1284, %v1309
        %v1372 = vadd.f32 %v1285, %v1329
        %v1373 = vadd.f32 %v1286, %v1349
        %v1374 = vadd.f32 %v1287, %v1369
        %v1375 = vxor.u32 %v1371, 2147483648
        %v1376 = vxor.u32 %v1372, 2147483648
        %v1377 = vxor.u32 %v1373, 2147483648
        %v1378 = vmul.f32 %v1375, 1.442695
        %v1379 = vpow.pop %v1378
        %v1380 = vmul.f32 %v1376, 1.442695
        %v1381 = vpow.pop %v1380
        %v1382 = vmul.f32 %v1377, 1.442695
        %v1383 = vpow.pop %v1382
        %v1384 = vadd.f32 %v1379, 1.0
        %v1385 = vadd.f32 %v1381, 1.0
        %v1386 = vadd.f32 %v1383, 1.0
        %v1387 = vrcp.pop %v1384
        %v1388 = vmul.f32 %v1384, %v1387
        %v1389 = vsub.f32 1.0, %v1388
        %v1390 = vmul.f32 %v1387, %v1389
        %v1391 = vadd.f32 %v1387, %v1390
        %vm1392 = vweird.f32 %v1384
        %vm1393 = vweird.f32 %v1387
        %vm1394 = vmor %vm1392, %vm1393
        %v1395 = vsel %vm1394, %v1387, %v1391
        %v1396 = vand.u32 2147483647, %v1384
        %vm1397 = vcmp.eq.f32.partialorder %v1396, 8.507059e+37
        %v1398 = vand.u32 %v1384, 2147483648
        %v1399 = vor.u32 1.1754944e-38, %v1398
        %v1400 = vsel %vm1397, %v1399, %v1395
        %v1401 = vmul.f32 1.0, %v1400
        %v1402 = vrcp.pop %v1385
        %v1403 = vmul.f32 %v1385, %v1402
        %v1404 = vsub.f32 1.0, %v1403
        %v1405 = vmul.f32 %v1402, %v1404
        %v1406 = vadd.f32 %v1402, %v1405
        %vm1407 = vweird.f32 %v1385
        %vm1408 = vweird.f32 %v1402
        %vm1409 = vmor %vm1407, %vm1408
        %v1410 = vsel %vm1409, %v1402, %v1406
        %v1411 = vand.u32 2147483647, %v1385
        %vm1412 = vcmp.eq.f32.partialorder %v1411, 8.507059e+37
        %v1413 = vand.u32 %v1385, 2147483648
        %v1414 = vor.u32 1.1754944e-38, %v1413
        %v1415 = vsel %vm1412, %v1414, %v1410
        %v1416 = vmul.f32 1.0, %v1415
        %v1417 = vrcp.pop %v1386
        %v1418 = vmul.f32 %v1386, %v1417
        %v1419 = vsub.f32 1.0, %v1418
        %v1420 = vmul.f32 %v1417, %v1419
        %v1421 = vadd.f32 %v1417, %v1420
        %vm1422 = vweird.f32 %v1386
        %vm1423 = vweird.f32 %v1417
        %vm1424 = vmor %vm1422, %vm1423
        %v1425 = vsel %vm1424, %v1417, %v1421
        %v1426 = vand.u32 2147483647, %v1386
        %vm1427 = vcmp.eq.f32.partialorder %v1426, 8.507059e+37
        %v1428 = vand.u32 %v1386, 2147483648
        %v1429 = vor.u32 1.1754944e-38, %v1428
        %v1430 = vsel %vm1427, %v1429, %v1425
        %v1431 = vmul.f32 1.0, %v1430
        %v1432 = vtanh.pop %v1374
        %v1433 = vmul.f32 %v1416, %v1273
        %v1434 = vmul.f32 %v1401, %v1432
        %v1435 = vadd.f32 %v1433, %v1434
        %v1436 = vtanh.pop %v1435
        %v1437 = vmul.f32 %v1431, %v1436
        %1438 = vset.pattern.permute.xlu0 7
        %1439 = vperm.xlu0 %1438, %v267
        %v1440 = vpop.permute.xlu0 %1439
        %v1442 = vmul.f32 %v1440, %v274
        %v1443 = vmul.f32 %v1440, %v275
        %v1444 = vmul.f32 %v1440, %v276
        %v1445 = vmul.f32 %v1440, %v277
        %v1446 = vadd.f32 %v1442, %v287
        %v1447 = vadd.f32 %v1443, %v288
        %v1448 = vadd.f32 %v1444, %v289
        %v1449 = vadd.f32 %v1445, %v290
        %v1451 = vsel %vm315, %v1437, 0
        %1453 = vmatpush.msra.mxu0 0.0
        %1454 = vmatpush.msra.mxu0 0.0
        %1455 = vmatpush.msra.mxu0 0.0
        %1456 = vmatpush.msra.mxu0 0.0
        %1457 = vmatpush.msra.mxu0 0.0
        %1458 = vmatpush.msra.mxu0 0.0
        %1459 = vmatpush.msra.mxu0 0.0
        %1460 = vmatpush.msra.mxu0 0.0
        %1461 = vmatpush.msra.mxu0 0.0
        %1462 = vmatpush.msra.mxu0 0.0
        %1463 = vmatpush.msra.mxu0 0.0
        %1464 = vmatpush.msra.mxu0 0.0
        %1465 = vmatpush.msra.mxu0 %v311
        %1466 = vmatpush.msra.mxu0 %v307
        %1467 = vmatpush.msra.mxu0 %v303
        %1468 = vmatpush.msra.mxu0 %v299
        %1469 = vmatmul.f32.gmra.mxu0 %v1451
        %v1470 = vpop.f32.mrf.mxu0
        %v1471 = vadd.f32 0.0, %v1470
        %1472 = vdwg.mxu0
        %1473 = vmatpush.msra.mxu0 0.0
        %1474 = vmatpush.msra.mxu0 0.0
        %1475 = vmatpush.msra.mxu0 0.0
        %1476 = vmatpush.msra.mxu0 0.0
        %1477 = vmatpush.msra.mxu0 0.0
        %1478 = vmatpush.msra.mxu0 0.0
        %1479 = vmatpush.msra.mxu0 0.0
        %1480 = vmatpush.msra.mxu0 0.0
        %1481 = vmatpush.msra.mxu0 0.0
        %1482 = vmatpush.msra.mxu0 0.0
        %1483 = vmatpush.msra.mxu0 0.0
        %1484 = vmatpush.msra.mxu0 0.0
        %1485 = vmatpush.msra.mxu0 %v312
        %1486 = vmatpush.msra.mxu0 %v308
        %1487 = vmatpush.msra.mxu0 %v304
        %1488 = vmatpush.msra.mxu0 %v300
        %1489 = vmatmul.f32.gmra.mxu0 %v1451
        %v1490 = vpop.f32.mrf.mxu0
        %v1491 = vadd.f32 0.0, %v1490
        %1492 = vdwg.mxu0
        %1493 = vmatpush.msra.mxu0 0.0
        %1494 = vmatpush.msra.mxu0 0.0
        %1495 = vmatpush.msra.mxu0 0.0
        %1496 = vmatpush.msra.mxu0 0.0
        %1497 = vmatpush.msra.mxu0 0.0
        %1498 = vmatpush.msra.mxu0 0.0
        %1499 = vmatpush.msra.mxu0 0.0
        %1500 = vmatpush.msra.mxu0 0.0
        %1501 = vmatpush.msra.mxu0 0.0
        %1502 = vmatpush.msra.mxu0 0.0
        %1503 = vmatpush.msra.mxu0 0.0
        %1504 = vmatpush.msra.mxu0 0.0
        %1505 = vmatpush.msra.mxu0 %v313
        %1506 = vmatpush.msra.mxu0 %v309
        %1507 = vmatpush.msra.mxu0 %v305
        %1508 = vmatpush.msra.mxu0 %v301
        %1509 = vmatmul.f32.gmra.mxu0 %v1451
        %v1510 = vpop.f32.mrf.mxu0
        %v1511 = vadd.f32 0.0, %v1510
        %1512 = vdwg.mxu0
        %1513 = vmatpush.msra.mxu0 0.0
        %1514 = vmatpush.msra.mxu0 0.0
        %1515 = vmatpush.msra.mxu0 0.0
        %1516 = vmatpush.msra.mxu0 0.0
        %1517 = vmatpush.msra.mxu0 0.0
        %1518 = vmatpush.msra.mxu0 0.0
        %1519 = vmatpush.msra.mxu0 0.0
        %1520 = vmatpush.msra.mxu0 0.0
        %1521 = vmatpush.msra.mxu0 0.0
        %1522 = vmatpush.msra.mxu0 0.0
        %1523 = vmatpush.msra.mxu0 0.0
        %1524 = vmatpush.msra.mxu0 0.0
        %1525 = vmatpush.msra.mxu0 %v314
        %1526 = vmatpush.msra.mxu0 %v310
        %1527 = vmatpush.msra.mxu0 %v306
        %1528 = vmatpush.msra.mxu0 %v302
        %1529 = vmatmul.f32.gmra.mxu0 %v1451
        %v1530 = vpop.f32.mrf.mxu0
        %v1531 = vadd.f32 0.0, %v1530
        %1532 = vdwg.mxu0
        %v1533 = vadd.f32 %v1446, %v1471
        %v1534 = vadd.f32 %v1447, %v1491
        %v1535 = vadd.f32 %v1448, %v1511
        %v1536 = vadd.f32 %v1449, %v1531
        %v1537 = vxor.u32 %v1533, 2147483648
        %v1538 = vxor.u32 %v1534, 2147483648
        %v1539 = vxor.u32 %v1535, 2147483648
        %v1540 = vmul.f32 %v1537, 1.442695
        %v1541 = vpow.pop %v1540
        %v1542 = vmul.f32 %v1538, 1.442695
        %v1543 = vpow.pop %v1542
        %v1544 = vmul.f32 %v1539, 1.442695
        %v1545 = vpow.pop %v1544
        %v1546 = vadd.f32 %v1541, 1.0
        %v1547 = vadd.f32 %v1543, 1.0
        %v1548 = vadd.f32 %v1545, 1.0
        %v1549 = vrcp.pop %v1546
        %v1550 = vmul.f32 %v1546, %v1549
        %v1551 = vsub.f32 1.0, %v1550
        %v1552 = vmul.f32 %v1549, %v1551
        %v1553 = vadd.f32 %v1549, %v1552
        %vm1554 = vweird.f32 %v1546
        %vm1555 = vweird.f32 %v1549
        %vm1556 = vmor %vm1554, %vm1555
        %v1557 = vsel %vm1556, %v1549, %v1553
        %v1558 = vand.u32 2147483647, %v1546
        %vm1559 = vcmp.eq.f32.partialorder %v1558, 8.507059e+37
        %v1560 = vand.u32 %v1546, 2147483648
        %v1561 = vor.u32 1.1754944e-38, %v1560
        %v1562 = vsel %vm1559, %v1561, %v1557
        %v1563 = vmul.f32 1.0, %v1562
        %v1564 = vrcp.pop %v1547
        %v1565 = vmul.f32 %v1547, %v1564
        %v1566 = vsub.f32 1.0, %v1565
        %v1567 = vmul.f32 %v1564, %v1566
        %v1568 = vadd.f32 %v1564, %v1567
        %vm1569 = vweird.f32 %v1547
        %vm1570 = vweird.f32 %v1564
        %vm1571 = vmor %vm1569, %vm1570
        %v1572 = vsel %vm1571, %v1564, %v1568
        %v1573 = vand.u32 2147483647, %v1547
        %vm1574 = vcmp.eq.f32.partialorder %v1573, 8.507059e+37
        %v1575 = vand.u32 %v1547, 2147483648
        %v1576 = vor.u32 1.1754944e-38, %v1575
        %v1577 = vsel %vm1574, %v1576, %v1572
        %v1578 = vmul.f32 1.0, %v1577
        %v1579 = vrcp.pop %v1548
        %v1580 = vmul.f32 %v1548, %v1579
        %v1581 = vsub.f32 1.0, %v1580
        %v1582 = vmul.f32 %v1579, %v1581
        %v1583 = vadd.f32 %v1579, %v1582
        %vm1584 = vweird.f32 %v1548
        %vm1585 = vweird.f32 %v1579
        %vm1586 = vmor %vm1584, %vm1585
        %v1587 = vsel %vm1586, %v1579, %v1583
        %v1588 = vand.u32 2147483647, %v1548
        %vm1589 = vcmp.eq.f32.partialorder %v1588, 8.507059e+37
        %v1590 = vand.u32 %v1548, 2147483648
        %v1591 = vor.u32 1.1754944e-38, %v1590
        %v1592 = vsel %vm1589, %v1591, %v1587
        %v1593 = vmul.f32 1.0, %v1592
        %v1594 = vtanh.pop %v1536
        %v1595 = vmul.f32 %v1578, %v1435
        %v1596 = vmul.f32 %v1563, %v1594
        %v1597 = vadd.f32 %v1595, %v1596
        %v1598 = vtanh.pop %v1597
        %v1599 = vmul.f32 %v1593, %v1598
        %v1600 = vld [vmem:[%s4] sm:$0x1]
        %v1602 = vperm.slane %v1600, 0
        %v1604 = vmul.f32 %v1599, %v1602
        %1605 = vadd.xlane.f32.xlu0 %v1604
        %v1606 = vpop.xlane.xlu0 %1605
        %s1607 = sld [smem:[#allocation2]]
        %v1608 = vstv %s1607
        %v1609 = vadd.f32 %v1606, %v1608
        %1610 = vst [vmem:[%s260] sm:$0xff] %v1609
        %s1611 = sand.u32 %s161, 1
        %s1612 = scalar_lea.sflag [#allocation5], %s1611
        %s1613 = sand.u32 %s161, 1
        %s1614 = smul.addr %s1613, 8
        %s1615 = scalar_lea.vmem [#allocation6], %s1614
        // Predicated region
        $region49: #{tpu_custom_call.1} parent=43 // pred_check
          %p1616 = pneg %p171
        $region50: #{tpu_custom_call.1} parent=43 // pred_check_branch
          %1618 = sbr.rel (%p1616) target = $region52
        $region51: #{tpu_custom_call.1} parent=43 // pred_region
          %1620 = vsyncadd %s1612, 0
          %s1621 = smul.addr %s22, 8
          %s1622 = scalar_lea.hbm %s6, %s1621
          %s1624 = sshll.u32 %s1615, 4
          %s1625 = int_to_ptr.vmem [resolvable:$true] %s1624
          %s1626 = sshll.u32 %s1622, 4
          %s1627 = int_to_ptr.hbm [resolvable:$true] %s1626
          %1629 = dma.vmem_to_hbm [thread:$0]  %s1625, 128, %s1627, %s1612
        $region52: #{tpu_custom_call.1} parent=43 // pred_fallthru
          _
      $region44: #{tpu_custom_call.1} parent=5 // pred_fallthru
        _
      %p1630 = scmp.le.s32.totalorder 2, %s17
      // Predicated region
      $region53: #{tpu_custom_call.1} parent=5 // pred_check
        %p1631 = pneg %p1630
      $region54: #{tpu_custom_call.1} parent=5 // pred_check_branch
        %1633 = sbr.rel (%p1631) target = $region56
      $region55: #{tpu_custom_call.1} parent=5 // pred_region
        %s1634 = ssub.s32 %s17, 2
        // Predicated region
        $region57: #{tpu_custom_call.1} parent=55 // pred_check
          %p1635 = pneg %p177
        $region58: #{tpu_custom_call.1} parent=55 // pred_check_branch
          %1637 = sbr.rel (%p1635) target = $region60
        $region59: #{tpu_custom_call.1} parent=55 // pred_region
          %s1638 = sand.u32 %s162, 1
          %s1639 = scalar_lea.sflag [#allocation5], %s1638
          %s1640 = sand.u32 %s162, 1
          %s1641 = smul.addr %s1640, 8
          %s1642 = scalar_lea.vmem [#allocation6], %s1641
          %1644 = dma.done %s1639, 128
        $region60: #{tpu_custom_call.1} parent=55 // pred_fallthru
          _
      $region56: #{tpu_custom_call.1} parent=5 // pred_fallthru
        _
    $region6: #{tpu_custom_call.1} parent=1 // loop_footer
      %s21 = sadd.s32 1, %s17
    $region7: #{tpu_custom_call.1} parent=1 // loop_footer_branch
      %16 = sbr.rel target = $region3
    $region8: #{tpu_custom_call.1} parent=1 // loop_exit
      _
    %1645 = vsyncpa [#allocation4], 1
    %s1646 = scalar_lea.sflag [#allocation4], 1
    %1647 = vsyncpa %s1646, 1
    %1648 = vsyncpa [#allocation5], 1
    %s1649 = scalar_lea.sflag [#allocation5], 1
    %1650 = vsyncpa %s1649, 1

</llo_original>
